<compile_context>
chip_gen: v7x
topology: tpu7x:2x2x1
jax: 0.10.0
libtpu: 0.0.40
codegen_flags: <defaults>
</compile_context>

<pallas_src>
import functools

import jax
import jax.numpy as jnp
from jax.experimental import pallas as pl
from jax.experimental.pallas import tpu as pltpu

EPS = 1e-12
TILE_T_MAX = 2048          # frame-tile cap (f32); fits scoped VMEM on v5e/v6e/v7x


def _round_up(x, m):
    return ((x + m - 1) // m) * m


# ---------------------------------------------------------------------------
# Pallas kernels
# ---------------------------------------------------------------------------
def _encoder_kernel(xunf_ref, w_ref, o_ref, st_ref):
    # xunf: (1, K, tile)  unfolded signal (lane-dense along frames)
    # w:    (F, K)        encoder basis (Conv1d weight squeezed, channel-major)
    # o:    (1, F, tile)  ReLU(w @ xunf)
    # st:   (1, 2, tile)  per-frame [sum_f, sum_f^2] of the ReLU'd features
    rhs = xunf_ref[0]                                        # (K, tile)
    acc = jnp.dot(w_ref[...], rhs, preferred_element_type=jnp.float32)
    y = jnp.maximum(acc, 0.0)                                # enc_nonlinear = ReLU
    o_ref[0] = y
    s1 = jnp.sum(y, axis=0, keepdims=True)                   # (1, tile)
    s2 = jnp.sum(y * y, axis=0, keepdims=True)
    st_ref[0] = jnp.concatenate([s1, s2], axis=0)            # (2, tile)


def encoder_forward(x_unf, enc_w, *, tile_t):
    B, K, Tp = x_unf.shape
    Fb = enc_w.shape[0]
    n_tiles = Tp // tile_t
    return pl.pallas_call(
        _encoder_kernel,
        out_shape=(jax.ShapeDtypeStruct((B, Fb, Tp), jnp.float32),
                   jax.ShapeDtypeStruct((B, 2, Tp), jnp.float32)),
        grid=(B, n_tiles),
        in_specs=[
            pl.BlockSpec((1, K, tile_t), lambda b, j: (b, 0, j)),
            pl.BlockSpec((Fb, K), lambda b, j: (0, 0)),
        ],
        out_specs=(
            pl.BlockSpec((1, Fb, tile_t), lambda b, j: (b, 0, j)),
            pl.BlockSpec((1, 2, tile_t), lambda b, j: (b, 0, j)),
        ),
        compiler_params=pltpu.CompilerParams(
            dimension_semantics=("parallel", "parallel")),
    )(x_unf, enc_w)


def _mask_decode_kernel(alpha_ref, w_ref, stats_ref, pk_ref, pb_ref,
                        lat_ref, fr_ref, *, n_basis, kernel_size):
    # w:     (1, F, tile)   encoder output
    # stats: (1, 3, tile)   per-frame [A, Bsum, Rcnt] from the fused Seg/cLN/OLA
    # pk:    (2F+K, F)      packed weights [Win@Wmap0 ; Wgate@Wmap0 ; Dec^T]
    # pb:    (F, 4)         per-channel columns [gamma | beta | b'_in | b'_gate]
    Fb, K = n_basis, kernel_size
    alpha = alpha_ref[0]
    w = w_ref[0]                                             # (F, tile)
    st = stats_ref[0]                                        # (3, tile)
    pk = pk_ref[...]
    pb = pb_ref[...]

    gamma = pb[:, 0:1]
    beta = pb[:, 1:2]
    b_in = pb[:, 2:3]
    b_gt = pb[:, 3:4]
    A = st[0:1, :]
    Bs = st[1:2, :]
    Rc = st[2:3, :]

    # Segment1d -> cLN -> OverlapAdd1d collapsed to a per-frame affine of w.
    x_ov = w * (gamma * A) - gamma * Bs + beta * Rc          # (F, tile)
    xp = jnp.where(x_ov >= 0, x_ov, alpha * x_ov)            # nn.PReLU (shared)

    wgtu = pk[0:2 * Fb, :]                                   # folded map+GTU (2F, F)
    dect = pk[2 * Fb:2 * Fb + K, :]                          # decoder basis^T (K, F)

    z = jnp.dot(wgtu.astype(jnp.bfloat16), xp.astype(jnp.bfloat16),
                preferred_element_type=jnp.float32)          # (2F, tile)
    a = jnp.tanh(z[0:Fb, :] + b_in)
    g = jax.nn.sigmoid(z[Fb:2 * Fb, :] + b_gt)
    m0 = jnp.maximum(a * g, 0.0)                             # mask_nonlinear = ReLU

    lat0 = w * m0                                            # source 0: w * mask0
    lat1 = w - lat0                                          # source 1: w * (1-mask0)
    lat_ref[0, 0] = lat0
    lat_ref[0, 1] = lat1
    fr_ref[0, 0] = jnp.dot(dect, lat0, preferred_element_type=jnp.float32)
    fr_ref[0, 1] = jnp.dot(dect, lat1, preferred_element_type=jnp.float32)


def mask_decode_forward(alpha, w_pad, sep_stats, packed_w, packed_b, *,
                        kernel_size, tile_t):
    B, Fb, Tp = w_pad.shape
    K = kernel_size
    P = packed_w.shape[0]
    n_tiles = Tp // tile_t
    return pl.pallas_call(
        functools.partial(_mask_decode_kernel, n_basis=Fb, kernel_size=K),
        out_shape=(jax.ShapeDtypeStruct((B, 2, Fb, Tp), jnp.float32),
                   jax.ShapeDtypeStruct((B, 2, K, Tp), jnp.float32)),
        grid=(B, n_tiles),
        in_specs=[
            pl.BlockSpec(memory_space=pltpu.MemorySpace.SMEM),    # PReLU alpha
            pl.BlockSpec((1, Fb, tile_t), lambda b, j: (b, 0, j)),
            pl.BlockSpec((1, 3, tile_t), lambda b, j: (b, 0, j)),
            pl.BlockSpec((P, Fb), lambda b, j: (0, 0)),
            pl.BlockSpec((Fb, 4), lambda b, j: (0, 0)),
        ],
        out_specs=(
            pl.BlockSpec((1, 2, Fb, tile_t), lambda b, j: (b, 0, 0, j)),
            pl.BlockSpec((1, 2, K, tile_t), lambda b, j: (b, 0, 0, j)),
        ),
        compiler_params=pltpu.CompilerParams(
            dimension_semantics=("parallel", "parallel")),
    )(alpha, w_pad, sep_stats, packed_w, packed_b)


# ---------------------------------------------------------------------------
# Parameters (deterministic init; shapes follow the torch module __init__)
# ---------------------------------------------------------------------------
def init_params(key, n_basis, kernel_size):
    Fb, K = n_basis, kernel_size
    ks = jax.random.split(key, 8)
    p = {}
    # encoder Conv1d(1, F, K) weight (F, 1, K) -> (F, K)
    p["enc_w"] = 0.1 * jax.random.normal(ks[0], (Fb, K), jnp.float32)
    # decoder ConvTranspose1d(F, 1, K) weight (F, 1, K) -> (F, K)
    dec_w = 0.1 * jax.random.normal(ks[1], (Fb, K), jnp.float32)
    # cLN affine
    gamma = jnp.ones((Fb,), jnp.float32)
    beta = jnp.zeros((Fb,), jnp.float32)
    # PReLU single shared parameter (torch default 0.25)
    p["alpha"] = jnp.array([0.25], jnp.float32)
    # map: Conv1d(F, 2F, 1). Only head 0 is live (mask[:,1] is overwritten with
    # 1 - mask[:,0] in the reference), so only rows [:F] are used.
    wmap = 0.1 * jax.random.normal(ks[2], (2 * Fb, Fb), jnp.float32)
    bmap = 0.01 * jax.random.normal(ks[3], (2 * Fb,), jnp.float32)
    # GTU1d: two Conv1d(F, F, 1)
    win = 0.1 * jax.random.normal(ks[4], (Fb, Fb), jnp.float32)
    b_in = 0.01 * jax.random.normal(ks[5], (Fb,), jnp.float32)
    wgt = 0.1 * jax.random.normal(ks[6], (Fb, Fb), jnp.float32)
    b_gt = 0.01 * jax.random.normal(ks[7], (Fb,), jnp.float32)
    # Fold map(head0) into the GTU (no nonlinearity between them; exact algebra).
    wmap0, bmap0 = wmap[:Fb], bmap[:Fb]
    w_in_f = win @ wmap0
    w_gt_f = wgt @ wmap0
    b_in_f = win @ bmap0 + b_in
    b_gt_f = wgt @ bmap0 + b_gt
    # Packed resident weight tile: [Win' ; Wgate' ; Dec^T]  (2F+K, F)
    p["packed_w"] = jnp.concatenate([w_in_f, w_gt_f, dec_w.T], axis=0
                                    ).astype(jnp.float32)
    # Per-channel columns: (F, 4) = [gamma | beta | b'_in | b'_gate]
    p["packed_b"] = jnp.stack([gamma, beta, b_in_f, b_gt_f], axis=1
                              ).astype(jnp.float32)
    return p


# ---------------------------------------------------------------------------
# Forward pass (GALRNet_SO.forward with sources=None)
# ---------------------------------------------------------------------------
def galrnet_so_forward(params, x, *, n_basis, kernel_size, stride,
                       chunk_size, hop_size, eps=EPS):
    B, c_in, T = x.shape
    assert c_in == 1
    assert kernel_size % stride == 0      # same contract as the torch module
    assert chunk_size % hop_size == 0     # enables reshape-based fold/unfold
    n_sources = 2
    Fb = n_basis
    n_phases = kernel_size // stride

    # ---- encoder-level padding / frame-tile geometry ----
    padding = (stride - (T - kernel_size) % stride) % stride
    pad_l, pad_r = padding // 2, padding - padding // 2
    Tp = T + padding
    n_chunks = Tp // stride
    n_frames = n_chunks - n_phases + 1

    tile_t = min(TILE_T_MAX, _round_up(n_frames, 128))
    Tf_pad = _round_up(n_frames, tile_t)                    # padded frame count
    n_chunks_pad = Tf_pad + n_phases - 1
    extra = n_chunks_pad * stride - Tp

    sig = jnp.pad(x[:, 0, :], ((0, 0), (pad_l, pad_r + extra)))   # (B, n_chunks_pad*stride)
    chunks = sig.reshape(B, n_chunks_pad, stride)
    # Unfold: (B, K, Tf_pad), lane-dense along frames (dup factor K/stride on raw audio only).
    x_unf = jnp.concatenate([chunks[:, r:r + Tf_pad, :] for r in range(n_phases)],
                            axis=-1).transpose(0, 2, 1)

    # ---- encoder (Pallas): single (F,K)@(K,tile) matmul + ReLU + per-frame stats ----
    w_pad, pq = encoder_forward(x_unf, params["enc_w"], tile_t=tile_t)
    # w_pad: (B, F, Tf_pad); pq: (B, 2, Tf_pad) = [sum_f w, sum_f w^2]

    # ---- Separator front (Segment1d -> cLN -> GALR(identity) -> OverlapAdd1d) ----
    # Collapsed to a per-frame affine x_ov = w*(gamma*A) - gamma*Bsum + beta*Rcnt.
    # TODO(synk): GALR block stack (intra-RNN + global attention) source was not
    # provided; treated as identity, which is what makes this closed form exact.
    p = pq[:, 0, :n_frames]
    q = pq[:, 1, :n_frames]
    sep_pad = (hop_size - (n_frames - chunk_size) % hop_size) % hop_size
    spl = sep_pad // 2
    spr = sep_pad - spl
    Tsp = n_frames + sep_pad
    R_seg = chunk_size // hop_size
    n_blocks = Tsp // hop_size
    S = n_blocks - R_seg + 1

    p_blk = jnp.pad(p, ((0, 0), (spl, spr))).reshape(B, n_blocks, hop_size)
    q_blk = jnp.pad(q, ((0, 0), (spl, spr))).reshape(B, n_blocks, hop_size)
    p_seg = jnp.concatenate([p_blk[:, r:r + S, :] for r in range(R_seg)], axis=-1)
    q_seg = jnp.concatenate([q_blk[:, r:r + S, :] for r in range(R_seg)], axis=-1)
    M = S * chunk_size
    cumP = jnp.cumsum(p_seg.reshape(B, M), axis=-1)          # cumulative over (C, seg-time)
    cumQ = jnp.cumsum(q_seg.reshape(B, M), axis=-1)
    cum_num = jnp.arange(1, M + 1, dtype=jnp.float32) * Fb
    mean = cumP / cum_num
    var = jnp.maximum(cumQ / cum_num - mean * mean, 0.0)
    # TODO(synk): eps placement kept as 1/(std+eps) to match the previous reference port.
    inv = 1.0 / (jnp.sqrt(var) + eps)
    mu_inv = mean * inv

    def fold1(g):        # OverlapAdd1d of a 1-channel segmented tensor (B,S,chunk)->(B,Tsp)
        out = None
        for r in range(R_seg):
            part = jnp.pad(g[:, :, r * hop_size:(r + 1) * hop_size],
                           ((0, 0), (r, R_seg - 1 - r), (0, 0)))
            out = part if out is None else out + part
        return out.reshape(g.shape[0], Tsp)

    A = fold1(inv.reshape(B, S, chunk_size))[:, spl:Tsp - spr]       # (B, n_frames)
    Bs = fold1(mu_inv.reshape(B, S, chunk_size))[:, spl:Tsp - spr]
    Rc = fold1(jnp.ones((1, S, chunk_size), jnp.float32))[:, spl:Tsp - spr]
    Rc = jnp.broadcast_to(Rc, (B, n_frames))
    sep_stats = jnp.stack([A, Bs, Rc], axis=1)                       # (B, 3, n_frames)
    sep_stats = jnp.pad(sep_stats, ((0, 0), (0, 0), (0, Tf_pad - n_frames)))

    # ---- fused cLN-affine + PReLU + (map∘GTU) + ReLU + mask apply + decoder matmul ----
    latent_pad, frames_pad = mask_decode_forward(
        params["alpha"], w_pad, sep_stats, params["packed_w"], params["packed_b"],
        kernel_size=kernel_size, tile_t=tile_t)
    latent = latent_pad[..., :n_frames]                     # (B, 2, F, T')
    frames = frames_pad[..., :n_frames]                     # (B, 2, K, T')

    # ---- decoder overlap-add (ConvTranspose1d OLA) as phase-padded sums ----
    R_dec = kernel_size // stride
    n_out_blocks = n_frames + R_dec - 1
    phase = frames.reshape(B, n_sources, R_dec, stride, n_frames)
    xT = None
    for r in range(R_dec):
        part = jnp.pad(phase[:, :, r],
                       ((0, 0), (0, 0), (0, 0), (r, R_dec - 1 - r)))
        xT = part if xT is None else xT + part              # (B, 2, stride, T'+R-1)
    L = n_out_blocks * stride                               # = (T'-1)*stride + K
    x_hat = jnp.transpose(xT, (0, 1, 3, 2)).reshape(B, n_sources, L)
    output = x_hat[:, :, pad_l:L - pad_r]                   # (B, 2, T)
    return output, latent


# ---------------------------------------------------------------------------
if __name__ == "__main__":
    key = jax.random.PRNGKey(0)
    kp, kx = jax.random.split(key)

    # Small config consistent with GALRNet_SO(n_basis, kernel_size, ...)
    n_basis, kernel_size, stride = 16, 16, 8
    chunk_size, hop_size = 8, 4          # sep_chunk_size / sep_hop_size
    B, T = 2, 128

    params = init_params(kp, n_basis, kernel_size)
    x = jax.random.normal(kx, (B, 1, T), jnp.float32)

    fwd = jax.jit(functools.partial(
        galrnet_so_forward,
        n_basis=n_basis, kernel_size=kernel_size, stride=stride,
        chunk_size=chunk_size, hop_size=hop_size))

    output, latent = fwd(params, x)
    jax.block_until_ready((output, latent))

    padding = (stride - (T - kernel_size) % stride) % stride
    n_frames = (T + padding - kernel_size) // stride + 1
    assert output.shape == (B, 2, T), output.shape
    assert latent.shape == (B, 2, n_basis, n_frames), latent.shape
    assert bool(jnp.all(jnp.isfinite(output)))
    assert bool(jnp.all(jnp.isfinite(latent)))
    print("KERNEL_OK")
</pallas_src>

<mosaic_0001>
module attributes {stable_mosaic.version = 11 : i64} {
  func.func @_encoder_kernel(%arg0: i32, %arg1: i32, %arg2: memref<1x16x128xf32, #tpu.memory_space<vmem>>, %arg3: memref<16x16xf32, #tpu.memory_space<vmem>>, %arg4: memref<1x16x128xf32, #tpu.memory_space<vmem>>, %arg5: memref<1x2x128xf32, #tpu.memory_space<vmem>>) attributes {dimension_semantics = [#tpu.dimension_semantics<parallel>, #tpu.dimension_semantics<parallel>], iteration_bounds = array<i64: 2, 1>, scalar_prefetch = 0 : i64, scratch_operands = 0 : i64, tpu.core_type = #tpu.core_type<tc>, window_params = [{transform_indices = @transform_0, window_bounds = array<i64: 1, 16, 128>}, {pipeline_mode = #tpu.pipeline_mode<synchronous>, transform_indices = @transform_1, window_bounds = array<i64: 16, 16>}, {transform_indices = @transform_2, window_bounds = array<i64: 1, 16, 128>}, {transform_indices = @transform_3, window_bounds = array<i64: 1, 2, 128>}]} {
    %c0 = arith.constant 0 : index
    %c0_0 = arith.constant 0 : index
    %c0_1 = arith.constant 0 : index
    %0 = vector.load %arg2[%c0, %c0_0, %c0_1] : memref<1x16x128xf32, #tpu.memory_space<vmem>>, vector<1x16x128xf32>
    %1 = vector.shape_cast %0 : vector<1x16x128xf32> to vector<16x128xf32>
    %c0_2 = arith.constant 0 : index
    %c0_3 = arith.constant 0 : index
    %2 = vector.load %arg3[%c0_2, %c0_3] : memref<16x16xf32, #tpu.memory_space<vmem>>, vector<16x16xf32>
    %cst = arith.constant dense<0.000000e+00> : vector<16x128xf32>
    %3 = tpu.matmul %2, %1, %cst {dimension_numbers = #tpu.dot_dimension_numbers<[1], [0], [0], [1], [0, 0, 1, 1], [], []>} : vector<16x16xf32>, vector<16x128xf32>, vector<16x128xf32> -> vector<16x128xf32>
    %cst_4 = arith.constant 0.000000e+00 : f32
    %4 = vector.broadcast %cst_4 : f32 to vector<16x128xf32>
    %5 = arith.maximumf %3, %4 : vector<16x128xf32>
    %c0_5 = arith.constant 0 : index
    %c0_6 = arith.constant 0 : index
    %c0_7 = arith.constant 0 : index
    %6 = vector.load %arg4[%c0_5, %c0_6, %c0_7] : memref<1x16x128xf32, #tpu.memory_space<vmem>>, vector<1x16x128xf32>
    %7 = vector.shape_cast %6 : vector<1x16x128xf32> to vector<16x128xf32>
    %8 = vector.shape_cast %5 : vector<16x128xf32> to vector<1x16x128xf32>
    tpu.vector_store %arg4[%c0_5, %c0_6, %c0_7], %8 {strides = array<i32>} : memref<1x16x128xf32, #tpu.memory_space<vmem>>, vector<1x16x128xf32>,
    %cst_8 = arith.constant dense<0.000000e+00> : vector<128xf32>
    %9 = vector.multi_reduction <add>, %5, %cst_8 [0] : vector<16x128xf32> to vector<128xf32>
    %10 = vector.shape_cast %9 : vector<128xf32> to vector<1x128xf32>
    %11 = arith.mulf %5, %5 : vector<16x128xf32>
    %cst_9 = arith.constant dense<0.000000e+00> : vector<128xf32>
    %12 = vector.multi_reduction <add>, %11, %cst_9 [0] : vector<16x128xf32> to vector<128xf32>
    %13 = vector.shape_cast %12 : vector<128xf32> to vector<1x128xf32>
    %14 = tpu.concatenate %10, %13 in 0 : vector<1x128xf32>, vector<1x128xf32> -> vector<2x128xf32>
    %c0_10 = arith.constant 0 : index
    %c0_11 = arith.constant 0 : index
    %c0_12 = arith.constant 0 : index
    %15 = vector.load %arg5[%c0_10, %c0_11, %c0_12] : memref<1x2x128xf32, #tpu.memory_space<vmem>>, vector<1x2x128xf32>
    %16 = vector.shape_cast %15 : vector<1x2x128xf32> to vector<2x128xf32>
    %17 = vector.shape_cast %14 : vector<2x128xf32> to vector<1x2x128xf32>
    tpu.vector_store %arg5[%c0_10, %c0_11, %c0_12], %17 {strides = array<i32>} : memref<1x2x128xf32, #tpu.memory_space<vmem>>, vector<1x2x128xf32>,
    return
  }
  func.func @transform_0(%arg0: i32, %arg1: i32) -> (i32, i32, i32) {
    %c0_i32 = arith.constant 0 : i32
    %c0_i32_0 = arith.constant 0 : i32
    return %arg0, %c0_i32, %arg1 : i32, i32, i32
  }
  func.func @transform_1(%arg0: i32, %arg1: i32) -> (i32, i32) {
    %c0_i32 = arith.constant 0 : i32
    %c0_i32_0 = arith.constant 0 : i32
    %c0_i32_1 = arith.constant 0 : i32
    return %c0_i32, %c0_i32_0 : i32, i32
  }
  func.func @transform_2(%arg0: i32, %arg1: i32) -> (i32, i32, i32) {
    %c0_i32 = arith.constant 0 : i32
    %c0_i32_0 = arith.constant 0 : i32
    return %arg0, %c0_i32, %arg1 : i32, i32, i32
  }
  func.func @transform_3(%arg0: i32, %arg1: i32) -> (i32, i32, i32) {
    %c0_i32 = arith.constant 0 : i32
    %c0_i32_0 = arith.constant 0 : i32
    return %arg0, %c0_i32, %arg1 : i32, i32, i32
  }
}

module attributes {stable_mosaic.version = 11 : i64} {
  func.func @_mask_decode_kernel(%arg0: i32, %arg1: i32, %arg2: memref<1xf32, #tpu.memory_space<smem>>, %arg3: memref<1x16x128xf32, #tpu.memory_space<vmem>>, %arg4: memref<1x3x128xf32, #tpu.memory_space<vmem>>, %arg5: memref<48x16xf32, #tpu.memory_space<vmem>>, %arg6: memref<16x4xf32, #tpu.memory_space<vmem>>, %arg7: memref<1x2x16x128xf32, #tpu.memory_space<vmem>>, %arg8: memref<1x2x16x128xf32, #tpu.memory_space<vmem>>) attributes {dimension_semantics = [#tpu.dimension_semantics<parallel>, #tpu.dimension_semantics<parallel>], iteration_bounds = array<i64: 2, 1>, scalar_prefetch = 0 : i64, scratch_operands = 0 : i64, tpu.core_type = #tpu.core_type<tc>, window_params = [{transform_indices = @transform_0, window_bounds = array<i64: 1>}, {transform_indices = @transform_1, window_bounds = array<i64: 1, 16, 128>}, {transform_indices = @transform_2, window_bounds = array<i64: 1, 3, 128>}, {pipeline_mode = #tpu.pipeline_mode<synchronous>, transform_indices = @transform_3, window_bounds = array<i64: 48, 16>}, {pipeline_mode = #tpu.pipeline_mode<synchronous>, transform_indices = @transform_4, window_bounds = array<i64: 16, 4>}, {transform_indices = @transform_5, window_bounds = array<i64: 1, 2, 16, 128>}, {transform_indices = @transform_6, window_bounds = array<i64: 1, 2, 16, 128>}]} {
    %c0 = arith.constant 0 : index
    %0 = memref.load %arg2[%c0] : memref<1xf32, #tpu.memory_space<smem>>
    %c0_0 = arith.constant 0 : index
    %c0_1 = arith.constant 0 : index
    %c0_2 = arith.constant 0 : index
    %1 = vector.load %arg3[%c0_0, %c0_1, %c0_2] : memref<1x16x128xf32, #tpu.memory_space<vmem>>, vector<1x16x128xf32>
    %2 = vector.shape_cast %1 : vector<1x16x128xf32> to vector<16x128xf32>
    %c0_3 = arith.constant 0 : index
    %c0_4 = arith.constant 0 : index
    %c0_5 = arith.constant 0 : index
    %3 = vector.load %arg4[%c0_3, %c0_4, %c0_5] : memref<1x3x128xf32, #tpu.memory_space<vmem>>, vector<1x3x128xf32>
    %4 = vector.shape_cast %3 : vector<1x3x128xf32> to vector<3x128xf32>
    %c0_6 = arith.constant 0 : index
    %c0_7 = arith.constant 0 : index
    %5 = vector.load %arg5[%c0_6, %c0_7] : memref<48x16xf32, #tpu.memory_space<vmem>>, vector<48x16xf32>
    %c0_8 = arith.constant 0 : index
    %c0_9 = arith.constant 0 : index
    %6 = vector.load %arg6[%c0_8, %c0_9] : memref<16x4xf32, #tpu.memory_space<vmem>>, vector<16x4xf32>
    %7 = vector.extract_strided_slice %6 {offsets = [0, 0], sizes = [16, 1], strides = [1, 1]} : vector<16x4xf32> to vector<16x1xf32>
    %8 = vector.extract_strided_slice %6 {offsets = [0, 1], sizes = [16, 1], strides = [1, 1]} : vector<16x4xf32> to vector<16x1xf32>
    %9 = vector.extract_strided_slice %6 {offsets = [0, 2], sizes = [16, 1], strides = [1, 1]} : vector<16x4xf32> to vector<16x1xf32>
    %10 = vector.extract_strided_slice %6 {offsets = [0, 3], sizes = [16, 1], strides = [1, 1]} : vector<16x4xf32> to vector<16x1xf32>
    %11 = vector.extract_strided_slice %4 {offsets = [0, 0], sizes = [1, 128], strides = [1, 1]} : vector<3x128xf32> to vector<1x128xf32>
    %12 = vector.extract_strided_slice %4 {offsets = [1, 0], sizes = [1, 128], strides = [1, 1]} : vector<3x128xf32> to vector<1x128xf32>
    %13 = vector.extract_strided_slice %4 {offsets = [2, 0], sizes = [1, 128], strides = [1, 1]} : vector<3x128xf32> to vector<1x128xf32>
    %14 = vector.broadcast %7 : vector<16x1xf32> to vector<16x128xf32>
    %15 = vector.broadcast %11 : vector<1x128xf32> to vector<16x128xf32>
    %16 = arith.mulf %14, %15 : vector<16x128xf32>
    %17 = arith.mulf %2, %16 : vector<16x128xf32>
    %18 = vector.broadcast %7 : vector<16x1xf32> to vector<16x128xf32>
    %19 = vector.broadcast %12 : vector<1x128xf32> to vector<16x128xf32>
    %20 = arith.mulf %18, %19 : vector<16x128xf32>
    %21 = arith.subf %17, %20 : vector<16x128xf32>
    %22 = vector.broadcast %8 : vector<16x1xf32> to vector<16x128xf32>
    %23 = vector.broadcast %13 : vector<1x128xf32> to vector<16x128xf32>
    %24 = arith.mulf %22, %23 : vector<16x128xf32>
    %25 = arith.addf %21, %24 : vector<16x128xf32>
    %cst = arith.constant 0.000000e+00 : f32
    %26 = vector.broadcast %cst : f32 to vector<16x128xf32>
    %27 = arith.cmpf oge, %25, %26 : vector<16x128xf32>
    %28 = vector.broadcast %0 : f32 to vector<16x128xf32>
    %29 = arith.mulf %28, %25 : vector<16x128xf32>
    %30 = arith.select %27, %25, %29 : vector<16x128xi1>, vector<16x128xf32>
    %31 = vector.extract_strided_slice %5 {offsets = [0, 0], sizes = [32, 16], strides = [1, 1]} : vector<48x16xf32> to vector<32x16xf32>
    %32 = vector.extract_strided_slice %5 {offsets = [32, 0], sizes = [16, 16], strides = [1, 1]} : vector<48x16xf32> to vector<16x16xf32>
    %33 = arith.truncf %31 : vector<32x16xf32> to vector<32x16xbf16>
    %34 = arith.truncf %30 : vector<16x128xf32> to vector<16x128xbf16>
    %cst_10 = arith.constant dense<0.000000e+00> : vector<32x128xf32>
    %35 = tpu.matmul %33, %34, %cst_10 {dimension_numbers = #tpu.dot_dimension_numbers<[1], [0], [0], [1], [0, 0, 1, 1], [], []>} : vector<32x16xbf16>, vector<16x128xbf16>, vector<32x128xf32> -> vector<32x128xf32>
    %36 = vector.extract_strided_slice %35 {offsets = [0, 0], sizes = [16, 128], strides = [1, 1]} : vector<32x128xf32> to vector<16x128xf32>
    %37 = vector.broadcast %9 : vector<16x1xf32> to vector<16x128xf32>
    %38 = arith.addf %36, %37 : vector<16x128xf32>
    %39 = math.tanh %38 : vector<16x128xf32>
    %40 = vector.extract_strided_slice %35 {offsets = [16, 0], sizes = [16, 128], strides = [1, 1]} : vector<32x128xf32> to vector<16x128xf32>
    %41 = vector.broadcast %10 : vector<16x1xf32> to vector<16x128xf32>
    %42 = arith.addf %40, %41 : vector<16x128xf32>
    %43 = arith.negf %42 : vector<16x128xf32>
    %44 = math.exp %43 : vector<16x128xf32>
    %cst_11 = arith.constant 1.000000e+00 : f32
    %45 = vector.broadcast %cst_11 : f32 to vector<16x128xf32>
    %46 = arith.addf %45, %44 : vector<16x128xf32>
    %47 = arith.divf %45, %46 : vector<16x128xf32>
    %48 = arith.mulf %39, %47 : vector<16x128xf32>
    %cst_12 = arith.constant 0.000000e+00 : f32
    %49 = vector.broadcast %cst_12 : f32 to vector<16x128xf32>
    %50 = arith.maximumf %48, %49 : vector<16x128xf32>
    %51 = arith.mulf %2, %50 : vector<16x128xf32>
    %52 = arith.subf %2, %51 : vector<16x128xf32>
    %c0_13 = arith.constant 0 : index
    %c0_14 = arith.constant 0 : index
    %c0_15 = arith.constant 0 : index
    %c0_16 = arith.constant 0 : index
    %53 = vector.load %arg7[%c0_13, %c0_14, %c0_15, %c0_16] : memref<1x2x16x128xf32, #tpu.memory_space<vmem>>, vector<1x1x16x128xf32>
    %54 = vector.shape_cast %53 : vector<1x1x16x128xf32> to vector<16x128xf32>
    %55 = vector.shape_cast %51 : vector<16x128xf32> to vector<1x1x16x128xf32>
    tpu.vector_store %arg7[%c0_13, %c0_14, %c0_15, %c0_16], %55 {strides = array<i32>} : memref<1x2x16x128xf32, #tpu.memory_space<vmem>>, vector<1x1x16x128xf32>,
    %c0_17 = arith.constant 0 : index
    %c1 = arith.constant 1 : index
    %c0_18 = arith.constant 0 : index
    %c0_19 = arith.constant 0 : index
    %56 = vector.load %arg7[%c0_17, %c1, %c0_18, %c0_19] : memref<1x2x16x128xf32, #tpu.memory_space<vmem>>, vector<1x1x16x128xf32>
    %57 = vector.shape_cast %56 : vector<1x1x16x128xf32> to vector<16x128xf32>
    %58 = vector.shape_cast %52 : vector<16x128xf32> to vector<1x1x16x128xf32>
    tpu.vector_store %arg7[%c0_17, %c1, %c0_18, %c0_19], %58 {strides = array<i32>} : memref<1x2x16x128xf32, #tpu.memory_space<vmem>>, vector<1x1x16x128xf32>,
    %cst_20 = arith.constant dense<0.000000e+00> : vector<16x128xf32>
    %59 = tpu.matmul %32, %51, %cst_20 {dimension_numbers = #tpu.dot_dimension_numbers<[1], [0], [0], [1], [0, 0, 1, 1], [], []>} : vector<16x16xf32>, vector<16x128xf32>, vector<16x128xf32> -> vector<16x128xf32>
    %c0_21 = arith.constant 0 : index
    %c0_22 = arith.constant 0 : index
    %c0_23 = arith.constant 0 : index
    %c0_24 = arith.constant 0 : index
    %60 = vector.load %arg8[%c0_21, %c0_22, %c0_23, %c0_24] : memref<1x2x16x128xf32, #tpu.memory_space<vmem>>, vector<1x1x16x128xf32>
    %61 = vector.shape_cast %60 : vector<1x1x16x128xf32> to vector<16x128xf32>
    %62 = vector.shape_cast %59 : vector<16x128xf32> to vector<1x1x16x128xf32>
    tpu.vector_store %arg8[%c0_21, %c0_22, %c0_23, %c0_24], %62 {strides = array<i32>} : memref<1x2x16x128xf32, #tpu.memory_space<vmem>>, vector<1x1x16x128xf32>,
    %cst_25 = arith.constant dense<0.000000e+00> : vector<16x128xf32>
    %63 = tpu.matmul %32, %52, %cst_25 {dimension_numbers = #tpu.dot_dimension_numbers<[1], [0], [0], [1], [0, 0, 1, 1], [], []>} : vector<16x16xf32>, vector<16x128xf32>, vector<16x128xf32> -> vector<16x128xf32>
    %c0_26 = arith.constant 0 : index
    %c1_27 = arith.constant 1 : index
    %c0_28 = arith.constant 0 : index
    %c0_29 = arith.constant 0 : index
    %64 = vector.load %arg8[%c0_26, %c1_27, %c0_28, %c0_29] : memref<1x2x16x128xf32, #tpu.memory_space<vmem>>, vector<1x1x16x128xf32>
    %65 = vector.shape_cast %64 : vector<1x1x16x128xf32> to vector<16x128xf32>
    %66 = vector.shape_cast %63 : vector<16x128xf32> to vector<1x1x16x128xf32>
    tpu.vector_store %arg8[%c0_26, %c1_27, %c0_28, %c0_29], %66 {strides = array<i32>} : memref<1x2x16x128xf32, #tpu.memory_space<vmem>>, vector<1x1x16x128xf32>,
    return
  }
  func.func @transform_0(%arg0: i32, %arg1: i32) -> i32 {
    %c0_i32 = arith.constant 0 : i32
    %c0_i32_0 = arith.constant 0 : i32
    return %c0_i32 : i32
  }
  func.func @transform_1(%arg0: i32, %arg1: i32) -> (i32, i32, i32) {
    %c0_i32 = arith.constant 0 : i32
    %c0_i32_0 = arith.constant 0 : i32
    return %arg0, %c0_i32, %arg1 : i32, i32, i32
  }
  func.func @transform_2(%arg0: i32, %arg1: i32) -> (i32, i32, i32) {
    %c0_i32 = arith.constant 0 : i32
    %c0_i32_0 = arith.constant 0 : i32
    return %arg0, %c0_i32, %arg1 : i32, i32, i32
  }
  func.func @transform_3(%arg0: i32, %arg1: i32) -> (i32, i32) {
    %c0_i32 = arith.constant 0 : i32
    %c0_i32_0 = arith.constant 0 : i32
    %c0_i32_1 = arith.constant 0 : i32
    return %c0_i32, %c0_i32_0 : i32, i32
  }
  func.func @transform_4(%arg0: i32, %arg1: i32) -> (i32, i32) {
    %c0_i32 = arith.constant 0 : i32
    %c0_i32_0 = arith.constant 0 : i32
    %c0_i32_1 = arith.constant 0 : i32
    return %c0_i32, %c0_i32_0 : i32, i32
  }
  func.func @transform_5(%arg0: i32, %arg1: i32) -> (i32, i32, i32, i32) {
    %c0_i32 = arith.constant 0 : i32
    %c0_i32_0 = arith.constant 0 : i32
    %c0_i32_1 = arith.constant 0 : i32
    return %arg0, %c0_i32, %c0_i32_0, %arg1 : i32, i32, i32, i32
  }
  func.func @transform_6(%arg0: i32, %arg1: i32) -> (i32, i32, i32, i32) {
    %c0_i32 = arith.constant 0 : i32
    %c0_i32_0 = arith.constant 0 : i32
    %c0_i32_1 = arith.constant 0 : i32
    return %arg0, %c0_i32, %c0_i32_0, %arg1 : i32, i32, i32, i32
  }
}

</mosaic_0001>

<llo_original>
// kernel: galrnet_so_forward.2
$region0: #{galrnet_so_forward.2}
  #allocation0 [shape = 'u32[]', space=smem, size = 0x4, offset = 0x4, fixed_abs, tag = 'smem constant byte address 0x4 - core index']
  #allocation1 [shape = 'u32[144,128]{1,0:T(1,128)}', space=vmem, size = 0x12000, scoped, tag = 'internal scratch']
  %s0 = inlined_call_operand.vmem [shape: f32[2,16,128], index: 0, kind: input, shape index: {}]
  %s1 = inlined_call_operand.vmem [shape: f32[16,16], index: 1, kind: input, shape index: {}]
  %s2 = inlined_call_operand.vmem [shape: f32[2,16,128], index: 2, kind: output, shape index: {0}]
  %s3 = inlined_call_operand.vmem [shape: f32[2,2,128], index: 3, kind: output, shape index: {1}]
  %4 = xla_tuple %s2, %s3
  %s5 = sld [smem:[#allocation0]]
  $region49: #{galrnet_so_forward.2} parent=0
    _
  %s7 = ssub.s32 1, %s5
  %s8 = scalar_select 0, %s7, %s5
  loop: start=0, step=1, limit=4
  $region2: #{galrnet_so_forward.2} parent=0 // loop_pre_header
    _
  $region3: #{galrnet_so_forward.2} parent=0 // loop_header
    %s10 = sphi 0, %s14
    %p11 = scmp.ge.s32.totalorder %s10, 4
    %s17 = sphi 0, %s29
    %s18 = sphi 0, %s25
    %s19 = sphi 0, %s17
    %s20 = sphi 0, %s18
    %s21 = sphi 0, %s19
    %s22 = sphi 0, %s20
    %s34 = sphi 0, %s36
    %s37 = sphi 0, %s34
    %s38 = sphi 0, %s37
    %s54 = sphi 0, %s38
    %s58 = sphi 0, %s58
    %s60 = sphi 0, %s58
    %s61 = sphi 0, %s60
    %s75 = sphi 0, %s61
    %s83 = sphi 0, %s85
    %s86 = sphi 0, %s83
    %s87 = sphi 0, %s86
    %s103 = sphi 0, %s87
    %s111 = sphi 0, %s113
    %s114 = sphi 0, %s111
    %s115 = sphi 0, %s114
    %s131 = sphi 0, %s115
  $region4: #{galrnet_so_forward.2} parent=0 // loop_header_branch
    %13 = sbr.rel (%p11) target = $region8
  $region5: #{galrnet_so_forward.2} parent=0 // loop_body
    %s15 = ssub.s32 %s10, 1
    %s16 = ssub.s32 %s10, 2
    %s23 = sadd.s32 1, %s18
    %p24 = scmp.ge.s32.totalorder %s23, 1
    %s25 = scalar_select %p24, 0, %s23
    %s26 = sadd.s32 1, %s17
    %s27 = scalar_select %p24, %s26, %s17
    %p28 = scmp.ge.s32.totalorder %s27, 2
    %s29 = scalar_select %p28, 0, %s27
    %s30 = ssub.s32 %s17, %s29
    %s31 = ssub.s32 %s18, %s25
    %s32 = sor.u32 %s30, %s31
    %p33 = scmp.eq.s32.totalorder %s32, 0
    %s35 = sadd.s32 %s34, 1
    %s36 = scalar_select %p33, %s34, %s35
    %p39 = pneg %p33
    %p40 = scmp.eq.s32.totalorder %s10, 1
    %p41 = por %p39, %p40
    %p42 = scmp.ne.s32.totalorder %s34, %s37
    %p43 = scmp.eq.s32.totalorder %s10, 0
    %p44 = por %p42, %p43
    %p45 = scmp.ne.s32.totalorder %s34, %s37
    %p46 = scmp.eq.s32.totalorder %s15, 1
    %p47 = por %p45, %p46
    %p48 = scmp.ne.s32.totalorder %s37, %s38
    %p49 = scmp.eq.s32.totalorder %s15, 0
    %p50 = por %p48, %p49
    %p51 = scmp.ne.s32.totalorder %s37, %s38
    %p52 = scmp.eq.s32.totalorder %s16, 1
    %p53 = por %p51, %p52
    %p55 = scmp.ne.s32.totalorder %s38, %s54
    %p56 = scmp.eq.s32.totalorder %s16, 0
    %p57 = por %p55, %p56
    %s59 = sadd.s32 %s58, 1
    %p62 = scmp.eq.s32.totalorder %s10, 1
    %p63 = scmp.ne.s32.totalorder %s58, %s60
    %p64 = scmp.eq.s32.totalorder %s10, 0
    %p65 = por %p63, %p64
    %p66 = scmp.ne.s32.totalorder %s58, %s60
    %p67 = scmp.eq.s32.totalorder %s15, 1
    %p68 = por %p66, %p67
    %p69 = scmp.ne.s32.totalorder %s60, %s61
    %p70 = scmp.eq.s32.totalorder %s15, 0
    %p71 = por %p69, %p70
    %p72 = scmp.ne.s32.totalorder %s60, %s61
    %p73 = scmp.eq.s32.totalorder %s16, 1
    %p74 = por %p72, %p73
    %p76 = scmp.ne.s32.totalorder %s61, %s75
    %p77 = scmp.eq.s32.totalorder %s16, 0
    %p78 = por %p76, %p77
    %s79 = ssub.s32 %s17, %s29
    %s80 = ssub.s32 %s18, %s25
    %s81 = sor.u32 %s79, %s80
    %p82 = scmp.eq.s32.totalorder %s81, 0
    %s84 = sadd.s32 %s83, 1
    %s85 = scalar_select %p82, %s83, %s84
    %p88 = pneg %p82
    %p89 = scmp.eq.s32.totalorder %s10, 1
    %p90 = por %p88, %p89
    %p91 = scmp.ne.s32.totalorder %s83, %s86
    %p92 = scmp.eq.s32.totalorder %s10, 0
    %p93 = por %p91, %p92
    %p94 = scmp.ne.s32.totalorder %s83, %s86
    %p95 = scmp.eq.s32.totalorder %s15, 1
    %p96 = por %p94, %p95
    %p97 = scmp.ne.s32.totalorder %s86, %s87
    %p98 = scmp.eq.s32.totalorder %s15, 0
    %p99 = por %p97, %p98
    %p100 = scmp.ne.s32.totalorder %s86, %s87
    %p101 = scmp.eq.s32.totalorder %s16, 1
    %p102 = por %p100, %p101
    %p104 = scmp.ne.s32.totalorder %s87, %s103
    %p105 = scmp.eq.s32.totalorder %s16, 0
    %p106 = por %p104, %p105
    %s107 = ssub.s32 %s17, %s29
    %s108 = ssub.s32 %s18, %s25
    %s109 = sor.u32 %s107, %s108
    %p110 = scmp.eq.s32.totalorder %s109, 0
    %s112 = sadd.s32 %s111, 1
    %s113 = scalar_select %p110, %s111, %s112
    %p116 = pneg %p110
    %p117 = scmp.eq.s32.totalorder %s10, 1
    %p118 = por %p116, %p117
    %p119 = scmp.ne.s32.totalorder %s111, %s114
    %p120 = scmp.eq.s32.totalorder %s10, 0
    %p121 = por %p119, %p120
    %p122 = scmp.ne.s32.totalorder %s111, %s114
    %p123 = scmp.eq.s32.totalorder %s15, 1
    %p124 = por %p122, %p123
    %p125 = scmp.ne.s32.totalorder %s114, %s115
    %p126 = scmp.eq.s32.totalorder %s15, 0
    %p127 = por %p125, %p126
    %p128 = scmp.ne.s32.totalorder %s114, %s115
    %p129 = scmp.eq.s32.totalorder %s16, 1
    %p130 = por %p128, %p129
    %p132 = scmp.ne.s32.totalorder %s115, %s131
    %p133 = scmp.eq.s32.totalorder %s16, 0
    %p134 = por %p132, %p133
    %p135 = scmp.le.s32.totalorder 1, %s10
    %p136 = scmp.lt.s32.totalorder %s10, 3
    %p137 = pnand %p135, %p136
    %p138 = pneg %p137
    // Predicated region
    $region9: #{galrnet_so_forward.2} parent=5 // pred_check
      _
    $region10: #{galrnet_so_forward.2} parent=5 // pred_check_branch
      %140 = sbr.rel (%p137) target = $region12
    $region11: #{galrnet_so_forward.2} parent=5 // pred_region
      %s141 = ssub.s32 %s10, 1
      // Predicated region
      $region13: #{galrnet_so_forward.2} parent=11 // pred_check
        %p142 = pneg %p71
      $region14: #{galrnet_so_forward.2} parent=11 // pred_check_branch
        %144 = sbr.rel (%p142) target = $region16
      $region15: #{galrnet_so_forward.2} parent=11 // pred_region
        _
      $region16: #{galrnet_so_forward.2} parent=11 // pred_fallthru
        _
    $region12: #{galrnet_so_forward.2} parent=5 // pred_fallthru
      _
    %p145 = scmp.lt.s32.totalorder %s10, 2
    // Predicated region
    $region17: #{galrnet_so_forward.2} parent=5 // pred_check
      %p146 = pneg %p145
    $region18: #{galrnet_so_forward.2} parent=5 // pred_check_branch
      %148 = sbr.rel (%p146) target = $region20
    $region19: #{galrnet_so_forward.2} parent=5 // pred_region
      // Predicated region
      $region21: #{galrnet_so_forward.2} parent=19 // pred_check
        %p149 = pneg %p44
      $region22: #{galrnet_so_forward.2} parent=19 // pred_check_branch
        %151 = sbr.rel (%p149) target = $region24
      $region23: #{galrnet_so_forward.2} parent=19 // pred_region
        %p152 = scmp.lt.s32.totalorder %s17, 1
        %s153 = scalar_select %p152, %s17, 1
        %p154 = scmp.lt.s32.totalorder %s18, 0
        %s155 = scalar_select %p154, %s18, 0
        %s156 = smul.addr %s153, 2
        %s157 = sadd.s32 %s155, %s156
        %s158 = smul.addr %s157, 8
        %s159 = scalar_lea.vmem %s0, %s158
      $region24: #{galrnet_so_forward.2} parent=19 // pred_fallthru
        _
    $region20: #{galrnet_so_forward.2} parent=5 // pred_fallthru
      _
    %p160 = scmp.le.s32.totalorder 1, %s10
    %p161 = scmp.lt.s32.totalorder %s10, 3
    %p162 = pnand %p160, %p161
    %p163 = pneg %p162
    // Predicated region
    $region25: #{galrnet_so_forward.2} parent=5 // pred_check
      _
    $region26: #{galrnet_so_forward.2} parent=5 // pred_check_branch
      %165 = sbr.rel (%p162) target = $region28
    $region27: #{galrnet_so_forward.2} parent=5 // pred_region
      %s166 = ssub.s32 %s10, 1
      %p167 = scmp.lt.s32.totalorder %s19, 1
      %s168 = scalar_select %p167, %s19, 1
      %p169 = scmp.lt.s32.totalorder %s20, 0
      %s170 = scalar_select %p169, %s20, 0
      %s171 = smul.addr %s168, 2
      %s172 = sadd.s32 %s170, %s171
      %s173 = smul.addr %s172, 8
      %s174 = scalar_lea.vmem %s0, %s173
      %p175 = pneg %p50
      %p176 = pneg %p47
      %p177 = pneg %p71
      %p178 = pneg %p68
      %p179 = pneg %p99
      %p180 = pneg %p96
      %p181 = scmp.lt.s32.totalorder %s19, 1
      %s182 = scalar_select %p181, %s19, 1
      %p183 = scmp.lt.s32.totalorder %s20, 0
      %s184 = scalar_select %p183, %s20, 0
      %s185 = smul.addr %s182, 2
      %s186 = sadd.s32 %s184, %s185
      %s187 = smul.addr %s186, 8
      %s188 = scalar_lea.vmem %s2, %s187
      %p189 = pneg %p127
      %p190 = pneg %p124
      %p191 = scmp.lt.s32.totalorder %s19, 1
      %s192 = scalar_select %p191, %s19, 1
      %p193 = scmp.lt.s32.totalorder %s20, 0
      %s194 = scalar_select %p193, %s20, 0
      %s195 = sadd.s32 %s194, %s192
      %s196 = smul.addr %s195, 2
      %s197 = scalar_lea.vmem %s3, %s196
      %p198 = scmp.lt.s32.totalorder %s19, 1
      %s199 = scalar_select %p198, %s19, 1
      %p200 = scmp.lt.s32.totalorder %s20, 0
      %s201 = scalar_select %p200, %s20, 0
      %s202 = smul.addr %s199, 2
      %s203 = sadd.s32 %s201, %s202
      %s204 = smul.addr %s203, 8
      %s205 = scalar_lea.vmem %s0, %s204
      %p206 = scmp.lt.s32.totalorder %s19, 1
      %s207 = scalar_select %p206, %s19, 1
      %p208 = scmp.lt.s32.totalorder %s20, 0
      %s209 = scalar_select %p208, %s20, 0
      %s210 = smul.addr %s207, 2
      %s211 = sadd.s32 %s209, %s210
      %s212 = smul.addr %s211, 8
      %s213 = scalar_lea.vmem %s2, %s212
      %p214 = scmp.lt.s32.totalorder %s19, 1
      %s215 = scalar_select %p214, %s19, 1
      %p216 = scmp.lt.s32.totalorder %s20, 0
      %s217 = scalar_select %p216, %s20, 0
      %s218 = sadd.s32 %s217, %s215
      %s219 = smul.addr %s218, 2
      %s220 = scalar_lea.vmem %s3, %s219
      %v221 = vld [vmem:[%s205] sm:$0xff]
      %v222 = vld [vmem:[%s205 + $0x8] sm:$0xff]
      %v223 = vld [vmem:[%s1] sm:$0xff]
      %v224 = vld [vmem:[%s1 + $0x8] sm:$0xff]
      %vm225 = vcmask 130048
      %v227 = vsel %vm225, %v223, 0
      %v230 = vsel %vm225, %v224, 0
      %232 = vmatprep.subr.mxu0 0.0
      %233 = vmatpush1.msra.mxu0 %v221
      %234 = vmatprep.subr.mxu0 0.0
      %235 = vmatpush1.msra.mxu0 %v222
      %236 = vmatprep.subr.mxu0 0.0
      %237 = vmatpush1.msra.mxu0 0.0
      %238 = vmatprep.subr.mxu0 0.0
      %239 = vmatpush1.msra.mxu0 0.0
      %240 = vmatprep.subr.mxu0 0.0
      %241 = vmatpush1.msra.mxu0 0.0
      %242 = vmatprep.subr.mxu0 0.0
      %243 = vmatpush1.msra.mxu0 0.0
      %244 = vmatprep.subr.mxu0 0.0
      %245 = vmatpush1.msra.mxu0 0.0
      %246 = vmatprep.subr.mxu0 0.0
      %247 = vmatpush1.msra.mxu0 0.0
      %248 = vmatprep.subr.mxu0 0.0
      %249 = vmatpush1.msra.mxu0 0.0
      %250 = vmatprep.subr.mxu0 0.0
      %251 = vmatpush1.msra.mxu0 0.0
      %252 = vmatprep.subr.mxu0 0.0
      %253 = vmatpush1.msra.mxu0 0.0
      %254 = vmatprep.subr.mxu0 0.0
      %255 = vmatpush1.msra.mxu0 0.0
      %256 = vmatprep.subr.mxu0 0.0
      %257 = vmatpush1.msra.mxu0 0.0
      %258 = vmatprep.subr.mxu0 0.0
      %259 = vmatpush1.msra.mxu0 0.0
      %260 = vmatprep.subr.mxu0 0.0
      %261 = vmatpush1.msra.mxu0 0.0
      %262 = vmatprep.subr.mxu0 0.0
      %263 = vmatpush1.msra.mxu0 0.0
      %264 = vmatprep.subr.mxu0 0.0
      %265 = vmatpush1.msra.mxu0 0.0
      %266 = vmatprep.subr.mxu0 0.0
      %267 = vmatpush1.msra.mxu0 0.0
      %268 = vmatprep.subr.mxu0 0.0
      %269 = vmatpush1.msra.mxu0 0.0
      %270 = vmatprep.subr.mxu0 0.0
      %271 = vmatpush1.msra.mxu0 0.0
      %272 = vmatprep.subr.mxu0 0.0
      %273 = vmatpush1.msra.mxu0 0.0
      %274 = vmatprep.subr.mxu0 0.0
      %275 = vmatpush1.msra.mxu0 0.0
      %276 = vmatprep.subr.mxu0 0.0
      %277 = vmatpush1.msra.mxu0 0.0
      %278 = vmatprep.subr.mxu0 0.0
      %279 = vmatpush1.msra.mxu0 0.0
      %280 = vmatprep.subr.mxu0 0.0
      %281 = vmatpush1.msra.mxu0 0.0
      %282 = vmatprep.subr.mxu0 0.0
      %283 = vmatpush1.msra.mxu0 0.0
      %284 = vmatprep.subr.mxu0 0.0
      %285 = vmatpush1.msra.mxu0 0.0
      %286 = vmatprep.subr.mxu0 0.0
      %287 = vmatpush1.msra.mxu0 0.0
      %288 = vmatprep.subr.mxu0 0.0
      %289 = vmatpush1.msra.mxu0 0.0
      %290 = vmatprep.subr.mxu0 0.0
      %291 = vmatpush1.msra.mxu0 0.0
      %292 = vmatprep.subr.mxu0 0.0
      %293 = vmatpush1.msra.mxu0 0.0
      %294 = vmatprep.subr.mxu0 0.0
      %295 = vmatpush1.msra.mxu0 0.0
      %296 = vmatprep.mubr.f32.mxu0 0.0
      %297 = vmatmul.mubr.f32.gmra.mrb[0].mxu0 %v227
      %v298 = vpop.f32.mrb[0].mxu0
      %v299 = vadd.f32 0.0, %v298
      %v300 = vpop.f32.mrb[0].mxu0
      %301 = vmatprep.mubr.f32.mxu0 0.0
      %302 = vmatmul.mubr.f32.gmra.mrb[0].mxu0 %v230
      %v303 = vpop.f32.mrb[0].mxu0
      %v304 = vadd.f32 0.0, %v303
      %v305 = vpop.f32.mrb[0].mxu0
      %306 = vdwg.mxu0
      %v307 = vmax.f32 %v299, 0.0
      %v308 = vmax.f32 %v304, 0.0
      %309 = vst [vmem:[%s213] sm:$0xff] %v307
      %310 = vst [vmem:[%s213 + $0x8] sm:$0xff] %v308
      %v311 = vadd.f32 %v307, %v308
      %v312 = vrot.slane %v311, 4
      %v313 = vadd.f32 %v311, %v312
      %v314 = vrot.slane %v313, 2
      %v315 = vadd.f32 %v313, %v314
      %v316 = vrot.slane %v315, 1
      %v317 = vadd.f32 %v315, %v316
      %v318 = vmul.f32 %v307, %v307
      %v319 = vmul.f32 %v308, %v308
      %v320 = vadd.f32 %v318, %v319
      %v321 = vrot.slane %v320, 4
      %v322 = vadd.f32 %v320, %v321
      %v323 = vrot.slane %v322, 2
      %v324 = vadd.f32 %v322, %v323
      %v325 = vrot.slane %v324, 1
      %v326 = vadd.f32 %v324, %v325
      %vm327 = vcmask 1040384
      %v328 = vsel %vm327, %v317, %v326
      %329 = vst [vmem:[%s220] sm:$0x3] %v328
      %p330 = scmp.lt.s32.totalorder %s19, 1
      %s331 = scalar_select %p330, %s19, 1
      %p332 = scmp.lt.s32.totalorder %s20, 0
      %s333 = scalar_select %p332, %s20, 0
      %s334 = smul.addr %s331, 2
      %s335 = sadd.s32 %s333, %s334
      %s336 = smul.addr %s335, 8
      %s337 = scalar_lea.vmem %s2, %s336
      %p338 = scmp.lt.s32.totalorder %s19, 1
      %s339 = scalar_select %p338, %s19, 1
      %p340 = scmp.lt.s32.totalorder %s20, 0
      %s341 = scalar_select %p340, %s20, 0
      %s342 = sadd.s32 %s341, %s339
      %s343 = smul.addr %s342, 2
      %s344 = scalar_lea.vmem %s3, %s343
      // Predicated region
      $region29: #{galrnet_so_forward.2} parent=27 // pred_check
        %p345 = pneg %p96
      $region30: #{galrnet_so_forward.2} parent=27 // pred_check_branch
        %347 = sbr.rel (%p345) target = $region32
      $region31: #{galrnet_so_forward.2} parent=27 // pred_region
        _
      $region32: #{galrnet_so_forward.2} parent=27 // pred_fallthru
        _
      // Predicated region
      $region33: #{galrnet_so_forward.2} parent=27 // pred_check
        %p348 = pneg %p124
      $region34: #{galrnet_so_forward.2} parent=27 // pred_check_branch
        %350 = sbr.rel (%p348) target = $region36
      $region35: #{galrnet_so_forward.2} parent=27 // pred_region
        _
      $region36: #{galrnet_so_forward.2} parent=27 // pred_fallthru
        _
    $region28: #{galrnet_so_forward.2} parent=5 // pred_fallthru
      _
    %p351 = scmp.le.s32.totalorder 2, %s10
    // Predicated region
    $region37: #{galrnet_so_forward.2} parent=5 // pred_check
      %p352 = pneg %p351
    $region38: #{galrnet_so_forward.2} parent=5 // pred_check_branch
      %354 = sbr.rel (%p352) target = $region40
    $region39: #{galrnet_so_forward.2} parent=5 // pred_region
      %s355 = ssub.s32 %s10, 2
      // Predicated region
      $region41: #{galrnet_so_forward.2} parent=39 // pred_check
        %p356 = pneg %p102
      $region42: #{galrnet_so_forward.2} parent=39 // pred_check_branch
        %358 = sbr.rel (%p356) target = $region44
      $region43: #{galrnet_so_forward.2} parent=39 // pred_region
        %p359 = scmp.lt.s32.totalorder %s21, 1
        %s360 = scalar_select %p359, %s21, 1
        %p361 = scmp.lt.s32.totalorder %s22, 0
        %s362 = scalar_select %p361, %s22, 0
        %s363 = smul.addr %s360, 2
        %s364 = sadd.s32 %s362, %s363
        %s365 = smul.addr %s364, 8
        %s366 = scalar_lea.vmem %s2, %s365
      $region44: #{galrnet_so_forward.2} parent=39 // pred_fallthru
        _
      // Predicated region
      $region45: #{galrnet_so_forward.2} parent=39 // pred_check
        %p367 = pneg %p130
      $region46: #{galrnet_so_forward.2} parent=39 // pred_check_branch
        %369 = sbr.rel (%p367) target = $region48
      $region47: #{galrnet_so_forward.2} parent=39 // pred_region
        %p370 = scmp.lt.s32.totalorder %s21, 1
        %s371 = scalar_select %p370, %s21, 1
        %p372 = scmp.lt.s32.totalorder %s22, 0
        %s373 = scalar_select %p372, %s22, 0
        %s374 = sadd.s32 %s373, %s371
        %s375 = smul.addr %s374, 2
        %s376 = scalar_lea.vmem %s3, %s375
      $region48: #{galrnet_so_forward.2} parent=39 // pred_fallthru
        _
    $region40: #{galrnet_so_forward.2} parent=5 // pred_fallthru
      _
  $region6: #{galrnet_so_forward.2} parent=0 // loop_footer
    %s14 = sadd.s32 1, %s10
  $region7: #{galrnet_so_forward.2} parent=0 // loop_footer_branch
    %9 = sbr.rel target = $region3
  $region8: #{galrnet_so_forward.2} parent=0 // loop_exit
    _

// kernel: galrnet_so_forward.3
$region0: #{galrnet_so_forward.3}
  #allocation0 [shape = 'u32[]', space=smem, size = 0x4, offset = 0x4, fixed_abs, tag = 'smem constant byte address 0x4 - core index']
  #allocation1 [shape = 'u32[144,128]{1,0:T(1,128)}', space=vmem, size = 0x12000, scoped, tag = 'internal scratch']
  #allocation2 [shape = 'f32[1]{0:T(128)S(6)}', space=smem, size = 0x200, scoped, tag = 'scoped memory for galrnet_so_forward.3']
  %s0 = inlined_call_operand.<no memory space> [shape: f32[1], index: 0, kind: input, shape index: {}]
  %s1 = inlined_call_operand.vmem [shape: f32[2,16,128], index: 1, kind: input, shape index: {}]
  %s2 = inlined_call_operand.vmem [shape: f32[2,3,128], index: 2, kind: input, shape index: {}]
  %s3 = inlined_call_operand.vmem [shape: f32[48,16], index: 3, kind: input, shape index: {}]
  %s4 = inlined_call_operand.vmem [shape: f32[16,4], index: 4, kind: input, shape index: {}]
  %s5 = inlined_call_operand.vmem [shape: f32[2,2,16,128], index: 5, kind: output, shape index: {0}]
  %s6 = inlined_call_operand.vmem [shape: f32[2,2,16,128], index: 6, kind: output, shape index: {1}]
  %7 = xla_tuple %s5, %s6
  %s8 = sld [smem:[#allocation0]]
  $region61: #{galrnet_so_forward.3} parent=0
    _
  %s10 = ssub.s32 1, %s8
  %s11 = scalar_select 0, %s10, %s8
  %12 = sst [smem:[#allocation2]] %s0
  loop: start=0, step=1, limit=4
  $region2: #{galrnet_so_forward.3} parent=0 // loop_pre_header
    _
  $region3: #{galrnet_so_forward.3} parent=0 // loop_header
    %s14 = sphi 0, %s18
    %p15 = scmp.ge.s32.totalorder %s14, 4
    %s21 = sphi 0, %s33
    %s22 = sphi 0, %s29
    %s23 = sphi 0, %s21
    %s24 = sphi 0, %s22
    %s25 = sphi 0, %s23
    %s26 = sphi 0, %s24
    %s34 = sphi 0, %s34
    %s36 = sphi 0, %s34
    %s37 = sphi 0, %s36
    %s51 = sphi 0, %s37
    %s59 = sphi 0, %s61
    %s62 = sphi 0, %s59
    %s63 = sphi 0, %s62
    %s79 = sphi 0, %s63
    %s87 = sphi 0, %s89
    %s90 = sphi 0, %s87
    %s91 = sphi 0, %s90
    %s107 = sphi 0, %s91
    %s111 = sphi 0, %s111
    %s113 = sphi 0, %s111
    %s114 = sphi 0, %s113
    %s128 = sphi 0, %s114
    %s132 = sphi 0, %s132
    %s134 = sphi 0, %s132
    %s135 = sphi 0, %s134
    %s149 = sphi 0, %s135
    %s157 = sphi 0, %s159
    %s160 = sphi 0, %s157
    %s161 = sphi 0, %s160
    %s177 = sphi 0, %s161
    %s185 = sphi 0, %s187
    %s188 = sphi 0, %s185
    %s189 = sphi 0, %s188
    %s205 = sphi 0, %s189
  $region4: #{galrnet_so_forward.3} parent=0 // loop_header_branch
    %17 = sbr.rel (%p15) target = $region8
  $region5: #{galrnet_so_forward.3} parent=0 // loop_body
    %s19 = ssub.s32 %s14, 1
    %s20 = ssub.s32 %s14, 2
    %s27 = sadd.s32 1, %s22
    %p28 = scmp.ge.s32.totalorder %s27, 1
    %s29 = scalar_select %p28, 0, %s27
    %s30 = sadd.s32 1, %s21
    %s31 = scalar_select %p28, %s30, %s21
    %p32 = scmp.ge.s32.totalorder %s31, 2
    %s33 = scalar_select %p32, 0, %s31
    %s35 = sadd.s32 %s34, 1
    %p38 = scmp.eq.s32.totalorder %s14, 1
    %p39 = scmp.ne.s32.totalorder %s34, %s36
    %p40 = scmp.eq.s32.totalorder %s14, 0
    %p41 = por %p39, %p40
    %p42 = scmp.ne.s32.totalorder %s34, %s36
    %p43 = scmp.eq.s32.totalorder %s19, 1
    %p44 = por %p42, %p43
    %p45 = scmp.ne.s32.totalorder %s36, %s37
    %p46 = scmp.eq.s32.totalorder %s19, 0
    %p47 = por %p45, %p46
    %p48 = scmp.ne.s32.totalorder %s36, %s37
    %p49 = scmp.eq.s32.totalorder %s20, 1
    %p50 = por %p48, %p49
    %p52 = scmp.ne.s32.totalorder %s37, %s51
    %p53 = scmp.eq.s32.totalorder %s20, 0
    %p54 = por %p52, %p53
    %s55 = ssub.s32 %s21, %s33
    %s56 = ssub.s32 %s22, %s29
    %s57 = sor.u32 %s55, %s56
    %p58 = scmp.eq.s32.totalorder %s57, 0
    %s60 = sadd.s32 %s59, 1
    %s61 = scalar_select %p58, %s59, %s60
    %p64 = pneg %p58
    %p65 = scmp.eq.s32.totalorder %s14, 1
    %p66 = por %p64, %p65
    %p67 = scmp.ne.s32.totalorder %s59, %s62
    %p68 = scmp.eq.s32.totalorder %s14, 0
    %p69 = por %p67, %p68
    %p70 = scmp.ne.s32.totalorder %s59, %s62
    %p71 = scmp.eq.s32.totalorder %s19, 1
    %p72 = por %p70, %p71
    %p73 = scmp.ne.s32.totalorder %s62, %s63
    %p74 = scmp.eq.s32.totalorder %s19, 0
    %p75 = por %p73, %p74
    %p76 = scmp.ne.s32.totalorder %s62, %s63
    %p77 = scmp.eq.s32.totalorder %s20, 1
    %p78 = por %p76, %p77
    %p80 = scmp.ne.s32.totalorder %s63, %s79
    %p81 = scmp.eq.s32.totalorder %s20, 0
    %p82 = por %p80, %p81
    %s83 = ssub.s32 %s21, %s33
    %s84 = ssub.s32 %s22, %s29
    %s85 = sor.u32 %s83, %s84
    %p86 = scmp.eq.s32.totalorder %s85, 0
    %s88 = sadd.s32 %s87, 1
    %s89 = scalar_select %p86, %s87, %s88
    %p92 = pneg %p86
    %p93 = scmp.eq.s32.totalorder %s14, 1
    %p94 = por %p92, %p93
    %p95 = scmp.ne.s32.totalorder %s87, %s90
    %p96 = scmp.eq.s32.totalorder %s14, 0
    %p97 = por %p95, %p96
    %p98 = scmp.ne.s32.totalorder %s87, %s90
    %p99 = scmp.eq.s32.totalorder %s19, 1
    %p100 = por %p98, %p99
    %p101 = scmp.ne.s32.totalorder %s90, %s91
    %p102 = scmp.eq.s32.totalorder %s19, 0
    %p103 = por %p101, %p102
    %p104 = scmp.ne.s32.totalorder %s90, %s91
    %p105 = scmp.eq.s32.totalorder %s20, 1
    %p106 = por %p104, %p105
    %p108 = scmp.ne.s32.totalorder %s91, %s107
    %p109 = scmp.eq.s32.totalorder %s20, 0
    %p110 = por %p108, %p109
    %s112 = sadd.s32 %s111, 1
    %p115 = scmp.eq.s32.totalorder %s14, 1
    %p116 = scmp.ne.s32.totalorder %s111, %s113
    %p117 = scmp.eq.s32.totalorder %s14, 0
    %p118 = por %p116, %p117
    %p119 = scmp.ne.s32.totalorder %s111, %s113
    %p120 = scmp.eq.s32.totalorder %s19, 1
    %p121 = por %p119, %p120
    %p122 = scmp.ne.s32.totalorder %s113, %s114
    %p123 = scmp.eq.s32.totalorder %s19, 0
    %p124 = por %p122, %p123
    %p125 = scmp.ne.s32.totalorder %s113, %s114
    %p126 = scmp.eq.s32.totalorder %s20, 1
    %p127 = por %p125, %p126
    %p129 = scmp.ne.s32.totalorder %s114, %s128
    %p130 = scmp.eq.s32.totalorder %s20, 0
    %p131 = por %p129, %p130
    %s133 = sadd.s32 %s132, 1
    %p136 = scmp.eq.s32.totalorder %s14, 1
    %p137 = scmp.ne.s32.totalorder %s132, %s134
    %p138 = scmp.eq.s32.totalorder %s14, 0
    %p139 = por %p137, %p138
    %p140 = scmp.ne.s32.totalorder %s132, %s134
    %p141 = scmp.eq.s32.totalorder %s19, 1
    %p142 = por %p140, %p141
    %p143 = scmp.ne.s32.totalorder %s134, %s135
    %p144 = scmp.eq.s32.totalorder %s19, 0
    %p145 = por %p143, %p144
    %p146 = scmp.ne.s32.totalorder %s134, %s135
    %p147 = scmp.eq.s32.totalorder %s20, 1
    %p148 = por %p146, %p147
    %p150 = scmp.ne.s32.totalorder %s135, %s149
    %p151 = scmp.eq.s32.totalorder %s20, 0
    %p152 = por %p150, %p151
    %s153 = ssub.s32 %s21, %s33
    %s154 = ssub.s32 %s22, %s29
    %s155 = sor.u32 %s153, %s154
    %p156 = scmp.eq.s32.totalorder %s155, 0
    %s158 = sadd.s32 %s157, 1
    %s159 = scalar_select %p156, %s157, %s158
    %p162 = pneg %p156
    %p163 = scmp.eq.s32.totalorder %s14, 1
    %p164 = por %p162, %p163
    %p165 = scmp.ne.s32.totalorder %s157, %s160
    %p166 = scmp.eq.s32.totalorder %s14, 0
    %p167 = por %p165, %p166
    %p168 = scmp.ne.s32.totalorder %s157, %s160
    %p169 = scmp.eq.s32.totalorder %s19, 1
    %p170 = por %p168, %p169
    %p171 = scmp.ne.s32.totalorder %s160, %s161
    %p172 = scmp.eq.s32.totalorder %s19, 0
    %p173 = por %p171, %p172
    %p174 = scmp.ne.s32.totalorder %s160, %s161
    %p175 = scmp.eq.s32.totalorder %s20, 1
    %p176 = por %p174, %p175
    %p178 = scmp.ne.s32.totalorder %s161, %s177
    %p179 = scmp.eq.s32.totalorder %s20, 0
    %p180 = por %p178, %p179
    %s181 = ssub.s32 %s21, %s33
    %s182 = ssub.s32 %s22, %s29
    %s183 = sor.u32 %s181, %s182
    %p184 = scmp.eq.s32.totalorder %s183, 0
    %s186 = sadd.s32 %s185, 1
    %s187 = scalar_select %p184, %s185, %s186
    %p190 = pneg %p184
    %p191 = scmp.eq.s32.totalorder %s14, 1
    %p192 = por %p190, %p191
    %p193 = scmp.ne.s32.totalorder %s185, %s188
    %p194 = scmp.eq.s32.totalorder %s14, 0
    %p195 = por %p193, %p194
    %p196 = scmp.ne.s32.totalorder %s185, %s188
    %p197 = scmp.eq.s32.totalorder %s19, 1
    %p198 = por %p196, %p197
    %p199 = scmp.ne.s32.totalorder %s188, %s189
    %p200 = scmp.eq.s32.totalorder %s19, 0
    %p201 = por %p199, %p200
    %p202 = scmp.ne.s32.totalorder %s188, %s189
    %p203 = scmp.eq.s32.totalorder %s20, 1
    %p204 = por %p202, %p203
    %p206 = scmp.ne.s32.totalorder %s189, %s205
    %p207 = scmp.eq.s32.totalorder %s20, 0
    %p208 = por %p206, %p207
    %p209 = scmp.le.s32.totalorder 1, %s14
    %p210 = scmp.lt.s32.totalorder %s14, 3
    %p211 = pnand %p209, %p210
    %p212 = pneg %p211
    // Predicated region
    $region9: #{galrnet_so_forward.3} parent=5 // pred_check
      _
    $region10: #{galrnet_so_forward.3} parent=5 // pred_check_branch
      %214 = sbr.rel (%p211) target = $region12
    $region11: #{galrnet_so_forward.3} parent=5 // pred_region
      %s215 = ssub.s32 %s14, 1
      // Predicated region
      $region13: #{galrnet_so_forward.3} parent=11 // pred_check
        %p216 = pneg %p47
      $region14: #{galrnet_so_forward.3} parent=11 // pred_check_branch
        %218 = sbr.rel (%p216) target = $region16
      $region15: #{galrnet_so_forward.3} parent=11 // pred_region
        _
      $region16: #{galrnet_so_forward.3} parent=11 // pred_fallthru
        _
      // Predicated region
      $region17: #{galrnet_so_forward.3} parent=11 // pred_check
        %p219 = pneg %p124
      $region18: #{galrnet_so_forward.3} parent=11 // pred_check_branch
        %221 = sbr.rel (%p219) target = $region20
      $region19: #{galrnet_so_forward.3} parent=11 // pred_region
        _
      $region20: #{galrnet_so_forward.3} parent=11 // pred_fallthru
        _
      // Predicated region
      $region21: #{galrnet_so_forward.3} parent=11 // pred_check
        %p222 = pneg %p145
      $region22: #{galrnet_so_forward.3} parent=11 // pred_check_branch
        %224 = sbr.rel (%p222) target = $region24
      $region23: #{galrnet_so_forward.3} parent=11 // pred_region
        _
      $region24: #{galrnet_so_forward.3} parent=11 // pred_fallthru
        _
    $region12: #{galrnet_so_forward.3} parent=5 // pred_fallthru
      _
    %p225 = scmp.lt.s32.totalorder %s14, 2
    // Predicated region
    $region25: #{galrnet_so_forward.3} parent=5 // pred_check
      %p226 = pneg %p225
    $region26: #{galrnet_so_forward.3} parent=5 // pred_check_branch
      %228 = sbr.rel (%p226) target = $region28
    $region27: #{galrnet_so_forward.3} parent=5 // pred_region
      // Predicated region
      $region29: #{galrnet_so_forward.3} parent=27 // pred_check
        %p229 = pneg %p69
      $region30: #{galrnet_so_forward.3} parent=27 // pred_check_branch
        %231 = sbr.rel (%p229) target = $region32
      $region31: #{galrnet_so_forward.3} parent=27 // pred_region
        %p232 = scmp.lt.s32.totalorder %s21, 1
        %s233 = scalar_select %p232, %s21, 1
        %p234 = scmp.lt.s32.totalorder %s22, 0
        %s235 = scalar_select %p234, %s22, 0
        %s236 = smul.addr %s233, 2
        %s237 = sadd.s32 %s235, %s236
        %s238 = smul.addr %s237, 8
        %s239 = scalar_lea.vmem %s1, %s238
      $region32: #{galrnet_so_forward.3} parent=27 // pred_fallthru
        _
      // Predicated region
      $region33: #{galrnet_so_forward.3} parent=27 // pred_check
        %p240 = pneg %p97
      $region34: #{galrnet_so_forward.3} parent=27 // pred_check_branch
        %242 = sbr.rel (%p240) target = $region36
      $region35: #{galrnet_so_forward.3} parent=27 // pred_region
        %p243 = scmp.lt.s32.totalorder %s21, 1
        %s244 = scalar_select %p243, %s21, 1
        %p245 = scmp.lt.s32.totalorder %s22, 0
        %s246 = scalar_select %p245, %s22, 0
        %s247 = sadd.s32 %s246, %s244
        %s248 = smul.addr %s247, 4
        %s249 = scalar_lea.vmem %s2, %s248
      $region36: #{galrnet_so_forward.3} parent=27 // pred_fallthru
        _
    $region28: #{galrnet_so_forward.3} parent=5 // pred_fallthru
      _
    %p250 = scmp.le.s32.totalorder 1, %s14
    %p251 = scmp.lt.s32.totalorder %s14, 3
    %p252 = pnand %p250, %p251
    %p253 = pneg %p252
    // Predicated region
    $region37: #{galrnet_so_forward.3} parent=5 // pred_check
      _
    $region38: #{galrnet_so_forward.3} parent=5 // pred_check_branch
      %255 = sbr.rel (%p252) target = $region40
    $region39: #{galrnet_so_forward.3} parent=5 // pred_region
      %s256 = ssub.s32 %s14, 1
      %p257 = pneg %p47
      %p258 = pneg %p44
      %p259 = scmp.lt.s32.totalorder %s23, 1
      %s260 = scalar_select %p259, %s23, 1
      %p261 = scmp.lt.s32.totalorder %s24, 0
      %s262 = scalar_select %p261, %s24, 0
      %s263 = smul.addr %s260, 2
      %s264 = sadd.s32 %s262, %s263
      %s265 = smul.addr %s264, 8
      %s266 = scalar_lea.vmem %s1, %s265
      %p267 = pneg %p75
      %p268 = pneg %p72
      %p269 = scmp.lt.s32.totalorder %s23, 1
      %s270 = scalar_select %p269, %s23, 1
      %p271 = scmp.lt.s32.totalorder %s24, 0
      %s272 = scalar_select %p271, %s24, 0
      %s273 = sadd.s32 %s272, %s270
      %s274 = smul.addr %s273, 4
      %s275 = scalar_lea.vmem %s2, %s274
      %p276 = pneg %p103
      %p277 = pneg %p100
      %p278 = pneg %p124
      %p279 = pneg %p121
      %p280 = pneg %p145
      %p281 = pneg %p142
      %p282 = pneg %p173
      %p283 = pneg %p170
      %p284 = scmp.lt.s32.totalorder %s23, 1
      %s285 = scalar_select %p284, %s23, 1
      %p286 = scmp.lt.s32.totalorder %s24, 0
      %s287 = scalar_select %p286, %s24, 0
      %s288 = smul.addr %s285, 4
      %s289 = sadd.s32 %s287, %s288
      %s290 = smul.addr %s289, 8
      %s291 = scalar_lea.vmem %s5, %s290
      %p292 = pneg %p201
      %p293 = pneg %p198
      %p294 = scmp.lt.s32.totalorder %s23, 1
      %s295 = scalar_select %p294, %s23, 1
      %p296 = scmp.lt.s32.totalorder %s24, 0
      %s297 = scalar_select %p296, %s24, 0
      %s298 = smul.addr %s295, 4
      %s299 = sadd.s32 %s297, %s298
      %s300 = smul.addr %s299, 8
      %s301 = scalar_lea.vmem %s6, %s300
      %p302 = scmp.lt.s32.totalorder %s23, 1
      %s303 = scalar_select %p302, %s23, 1
      %p304 = scmp.lt.s32.totalorder %s24, 0
      %s305 = scalar_select %p304, %s24, 0
      %s306 = smul.addr %s303, 2
      %s307 = sadd.s32 %s305, %s306
      %s308 = smul.addr %s307, 8
      %s309 = scalar_lea.vmem %s1, %s308
      %p310 = scmp.lt.s32.totalorder %s23, 1
      %s311 = scalar_select %p310, %s23, 1
      %p312 = scmp.lt.s32.totalorder %s24, 0
      %s313 = scalar_select %p312, %s24, 0
      %s314 = sadd.s32 %s313, %s311
      %s315 = smul.addr %s314, 4
      %s316 = scalar_lea.vmem %s2, %s315
      %p317 = scmp.lt.s32.totalorder %s23, 1
      %s318 = scalar_select %p317, %s23, 1
      %p319 = scmp.lt.s32.totalorder %s24, 0
      %s320 = scalar_select %p319, %s24, 0
      %s321 = smul.addr %s318, 4
      %s322 = sadd.s32 %s320, %s321
      %s323 = smul.addr %s322, 8
      %s324 = scalar_lea.vmem %s5, %s323
      %p325 = scmp.lt.s32.totalorder %s23, 1
      %s326 = scalar_select %p325, %s23, 1
      %p327 = scmp.lt.s32.totalorder %s24, 0
      %s328 = scalar_select %p327, %s24, 0
      %s329 = smul.addr %s326, 4
      %s330 = sadd.s32 %s328, %s329
      %s331 = smul.addr %s330, 8
      %s332 = scalar_lea.vmem %s6, %s331
      %s334 = sld [smem:[#allocation2]]
      %v335 = vld [vmem:[%s309] sm:$0xff]
      %v336 = vld [vmem:[%s309 + $0x8] sm:$0xff]
      %v337 = vld [vmem:[%s316] sm:$0x7]
      %v338 = vld [vmem:[%s3] sm:$0xff]
      %v339 = vld [vmem:[%s3 + $0x8] sm:$0xff]
      %v340 = vld [vmem:[%s3 + $0x10] sm:$0xff]
      %v341 = vld [vmem:[%s3 + $0x18] sm:$0xff]
      %v342 = vld [vmem:[%s3 + $0x20] sm:$0xff]
      %v343 = vld [vmem:[%s3 + $0x28] sm:$0xff]
      %v344 = vld [vmem:[%s4] sm:$0xff]
      %v345 = vld [vmem:[%s4 + $0x8] sm:$0xff]
      %347 = vset.pattern.permute.xlu0 0
      %348 = vperm.xlu0 %347, %v344
      %v349 = vpop.permute.xlu0 %348
      %352 = vset.pattern.permute.xlu0 0
      %353 = vperm.xlu0 %352, %v345
      %v354 = vpop.permute.xlu0 %353
      %v356 = vlaneseq
      %v357 = vshrl.u32 %v356, 7
      %v358 = vsub.s32 0, %v357
      %v359 = vrot.slane %v337, %v358
      %v360 = vmul.f32 %v349, %v359
      %v361 = vmul.f32 %v354, %v359
      %v362 = vmul.f32 %v335, %v360
      %v363 = vmul.f32 %v336, %v361
      %v364 = vlaneseq
      %v365 = vshrl.u32 %v364, 7
      %v366 = vsub.s32 1, %v365
      %v367 = vrot.slane %v337, %v366
      %v368 = vmul.f32 %v349, %v367
      %v369 = vmul.f32 %v354, %v367
      %v370 = vsub.f32 %v362, %v368
      %v371 = vsub.f32 %v363, %v369
      %372 = vset.pattern.permute.xlu0 1
      %373 = vperm.xlu0 %372, %v344
      %v374 = vpop.permute.xlu0 %373
      %376 = vset.pattern.permute.xlu0 1
      %377 = vperm.xlu0 %376, %v345
      %v378 = vpop.permute.xlu0 %377
      %v380 = vlaneseq
      %v381 = vshrl.u32 %v380, 7
      %v382 = vsub.s32 2, %v381
      %v383 = vrot.slane %v337, %v382
      %v384 = vmul.f32 %v374, %v383
      %v385 = vmul.f32 %v378, %v383
      %v386 = vadd.f32 %v370, %v384
      %v387 = vadd.f32 %v371, %v385
      %vm388 = vcmp.ge.f32.partialorder %v386, 0.0
      %vm389 = vcmp.ge.f32.partialorder %v387, 0.0
      %v390 = vstv %s334
      %v391 = vmul.f32 %v390, %v386
      %v392 = vmul.f32 %v390, %v387
      %v393 = vsel %vm388, %v386, %v391
      %v394 = vsel %vm389, %v387, %v392
      %v395 = vpack.c.bf16 %v339, %v338
      %v396 = vpack.c.bf16 %v341, %v340
      %v397 = vpack.c.bf16 %v394, %v393
      %vm398 = vcmask 130048
      %v400 = vsel %vm398, %v395, 0
      %v403 = vsel %vm398, %v396, 0
      %405 = vmatprep.subr.bf16.mxu0 0
      %406 = vmatpush1.bf16.msra.mxu0 %v397
      %407 = vmatprep.subr.bf16.mxu0 0
      %408 = vmatpush1.bf16.msra.mxu0 0
      %409 = vmatprep.subr.bf16.mxu0 0
      %410 = vmatpush1.bf16.msra.mxu0 0
      %411 = vmatprep.subr.bf16.mxu0 0
      %412 = vmatpush1.bf16.msra.mxu0 0
      %413 = vmatprep.subr.bf16.mxu0 0
      %414 = vmatpush1.bf16.msra.mxu0 0
      %415 = vmatprep.subr.bf16.mxu0 0
      %416 = vmatpush1.bf16.msra.mxu0 0
      %417 = vmatprep.subr.bf16.mxu0 0
      %418 = vmatpush1.bf16.msra.mxu0 0
      %419 = vmatprep.subr.bf16.mxu0 0
      %420 = vmatpush1.bf16.msra.mxu0 0
      %421 = vmatprep.subr.bf16.mxu0 0
      %422 = vmatpush1.bf16.msra.mxu0 0
      %423 = vmatprep.subr.bf16.mxu0 0
      %424 = vmatpush1.bf16.msra.mxu0 0
      %425 = vmatprep.subr.bf16.mxu0 0
      %426 = vmatpush1.bf16.msra.mxu0 0
      %427 = vmatprep.subr.bf16.mxu0 0
      %428 = vmatpush1.bf16.msra.mxu0 0
      %429 = vmatprep.subr.bf16.mxu0 0
      %430 = vmatpush1.bf16.msra.mxu0 0
      %431 = vmatprep.subr.bf16.mxu0 0
      %432 = vmatpush1.bf16.msra.mxu0 0
      %433 = vmatprep.subr.bf16.mxu0 0
      %434 = vmatpush1.bf16.msra.mxu0 0
      %435 = vmatprep.subr.bf16.mxu0 0
      %436 = vmatpush1.bf16.msra.mxu0 0
      %437 = vmatprep.mubr.bf16.mxu0 0
      %438 = vmatmul.mubr.bf16.gmra.mrb[0].mxu0 %v400
      %v439 = vpop.f32.mrb[0].mxu0
      %v440 = vadd.f32 0.0, %v439
      %v441 = vpop.f32.mrb[0].mxu0
      %v442 = vpop.f32.mrb[0].mxu0
      %v443 = vadd.f32 0.0, %v442
      %v444 = vpop.f32.mrb[0].mxu0
      %445 = vmatprep.mubr.bf16.mxu0 0
      %446 = vmatmul.mubr.bf16.gmra.mrb[0].mxu0 %v403
      %v447 = vpop.f32.mrb[0].mxu0
      %v448 = vadd.f32 0.0, %v447
      %v449 = vpop.f32.mrb[0].mxu0
      %v450 = vpop.f32.mrb[0].mxu0
      %v451 = vadd.f32 0.0, %v450
      %v452 = vpop.f32.mrb[0].mxu0
      %453 = vdwg.mxu0
      %454 = vset.pattern.permute.xlu0 2
      %455 = vperm.xlu0 %454, %v344
      %v456 = vpop.permute.xlu0 %455
      %458 = vset.pattern.permute.xlu0 2
      %459 = vperm.xlu0 %458, %v345
      %v460 = vpop.permute.xlu0 %459
      %v462 = vadd.f32 %v440, %v456
      %v463 = vadd.f32 %v443, %v460
      %v464 = vtanh.pop %v462
      %v465 = vtanh.pop %v463
      %466 = vset.pattern.permute.xlu0 3
      %467 = vperm.xlu0 %466, %v344
      %v468 = vpop.permute.xlu0 %467
      %470 = vset.pattern.permute.xlu0 3
      %471 = vperm.xlu0 %470, %v345
      %v472 = vpop.permute.xlu0 %471
      %v474 = vadd.f32 %v448, %v468
      %v475 = vadd.f32 %v451, %v472
      %v476 = vxor.u32 %v474, 2147483648
      %v477 = vxor.u32 %v475, 2147483648
      %v478 = vmul.f32 %v476, 1.442695
      %v479 = vpow.pop %v478
      %v480 = vmul.f32 %v477, 1.442695
      %v481 = vpow.pop %v480
      %v482 = vadd.f32 %v479, 1.0
      %v483 = vadd.f32 %v481, 1.0
      %v484 = vrcp.pop %v482
      %v485 = vmul.f32 1.0, %v484
      %v486 = vrcp.pop %v483
      %v487 = vmul.f32 1.0, %v486
      %v488 = vmul.f32 %v464, %v485
      %v489 = vmul.f32 %v465, %v487
      %v490 = vmax.f32 %v488, 0.0
      %v491 = vmax.f32 %v489, 0.0
      %v492 = vmul.f32 %v335, %v490
      %v493 = vmul.f32 %v336, %v491
      %v494 = vsub.f32 %v335, %v492
      %v495 = vsub.f32 %v336, %v493
      %496 = vst [vmem:[%s324] sm:$0xff] %v492
      %497 = vst [vmem:[%s324 + $0x8] sm:$0xff] %v493
      %s498 = scalar_lea.vmem %s324, 16
      %499 = vst [vmem:[%s498] sm:$0xff] %v494
      %500 = vst [vmem:[%s498 + $0x8] sm:$0xff] %v495
      %v502 = vsel %vm398, %v342, 0
      %v505 = vsel %vm398, %v343, 0
      %507 = vmatprep.subr.mxu0 0.0
      %508 = vmatpush1.msra.mxu0 %v492
      %509 = vmatprep.subr.mxu0 0.0
      %510 = vmatpush1.msra.mxu0 %v493
      %511 = vmatprep.subr.mxu0 0.0
      %512 = vmatpush1.msra.mxu0 0.0
      %513 = vmatprep.subr.mxu0 0.0
      %514 = vmatpush1.msra.mxu0 0.0
      %515 = vmatprep.subr.mxu0 0.0
      %516 = vmatpush1.msra.mxu0 0.0
      %517 = vmatprep.subr.mxu0 0.0
      %518 = vmatpush1.msra.mxu0 0.0
      %519 = vmatprep.subr.mxu0 0.0
      %520 = vmatpush1.msra.mxu0 0.0
      %521 = vmatprep.subr.mxu0 0.0
      %522 = vmatpush1.msra.mxu0 0.0
      %523 = vmatprep.subr.mxu0 0.0
      %524 = vmatpush1.msra.mxu0 0.0
      %525 = vmatprep.subr.mxu0 0.0
      %526 = vmatpush1.msra.mxu0 0.0
      %527 = vmatprep.subr.mxu0 0.0
      %528 = vmatpush1.msra.mxu0 0.0
      %529 = vmatprep.subr.mxu0 0.0
      %530 = vmatpush1.msra.mxu0 0.0
      %531 = vmatprep.subr.mxu0 0.0
      %532 = vmatpush1.msra.mxu0 0.0
      %533 = vmatprep.subr.mxu0 0.0
      %534 = vmatpush1.msra.mxu0 0.0
      %535 = vmatprep.subr.mxu0 0.0
      %536 = vmatpush1.msra.mxu0 0.0
      %537 = vmatprep.subr.mxu0 0.0
      %538 = vmatpush1.msra.mxu0 0.0
      %539 = vmatprep.subr.mxu0 0.0
      %540 = vmatpush1.msra.mxu0 0.0
      %541 = vmatprep.subr.mxu0 0.0
      %542 = vmatpush1.msra.mxu0 0.0
      %543 = vmatprep.subr.mxu0 0.0
      %544 = vmatpush1.msra.mxu0 0.0
      %545 = vmatprep.subr.mxu0 0.0
      %546 = vmatpush1.msra.mxu0 0.0
      %547 = vmatprep.subr.mxu0 0.0
      %548 = vmatpush1.msra.mxu0 0.0
      %549 = vmatprep.subr.mxu0 0.0
      %550 = vmatpush1.msra.mxu0 0.0
      %551 = vmatprep.subr.mxu0 0.0
      %552 = vmatpush1.msra.mxu0 0.0
      %553 = vmatprep.subr.mxu0 0.0
      %554 = vmatpush1.msra.mxu0 0.0
      %555 = vmatprep.subr.mxu0 0.0
      %556 = vmatpush1.msra.mxu0 0.0
      %557 = vmatprep.subr.mxu0 0.0
      %558 = vmatpush1.msra.mxu0 0.0
      %559 = vmatprep.subr.mxu0 0.0
      %560 = vmatpush1.msra.mxu0 0.0
      %561 = vmatprep.subr.mxu0 0.0
      %562 = vmatpush1.msra.mxu0 0.0
      %563 = vmatprep.subr.mxu0 0.0
      %564 = vmatpush1.msra.mxu0 0.0
      %565 = vmatprep.subr.mxu0 0.0
      %566 = vmatpush1.msra.mxu0 0.0
      %567 = vmatprep.subr.mxu0 0.0
      %568 = vmatpush1.msra.mxu0 0.0
      %569 = vmatprep.subr.mxu0 0.0
      %570 = vmatpush1.msra.mxu0 0.0
      %571 = vmatprep.mubr.f32.mxu0 0.0
      %572 = vmatmul.mubr.f32.gmra.mrb[0].mxu0 %v502
      %v573 = vpop.f32.mrb[0].mxu0
      %v574 = vadd.f32 0.0, %v573
      %v575 = vpop.f32.mrb[0].mxu0
      %576 = vmatprep.mubr.f32.mxu0 0.0
      %577 = vmatmul.mubr.f32.gmra.mrb[0].mxu0 %v505
      %v578 = vpop.f32.mrb[0].mxu0
      %v579 = vadd.f32 0.0, %v578
      %v580 = vpop.f32.mrb[0].mxu0
      %581 = vdwg.mxu0
      %582 = vst [vmem:[%s332] sm:$0xff] %v574
      %583 = vst [vmem:[%s332 + $0x8] sm:$0xff] %v579
      %584 = vmatprep.subr.mxu0 0.0
      %585 = vmatpush1.msra.mxu0 %v494
      %586 = vmatprep.subr.mxu0 0.0
      %587 = vmatpush1.msra.mxu0 %v495
      %588 = vmatprep.subr.mxu0 0.0
      %589 = vmatpush1.msra.mxu0 0.0
      %590 = vmatprep.subr.mxu0 0.0
      %591 = vmatpush1.msra.mxu0 0.0
      %592 = vmatprep.subr.mxu0 0.0
      %593 = vmatpush1.msra.mxu0 0.0
      %594 = vmatprep.subr.mxu0 0.0
      %595 = vmatpush1.msra.mxu0 0.0
      %596 = vmatprep.subr.mxu0 0.0
      %597 = vmatpush1.msra.mxu0 0.0
      %598 = vmatprep.subr.mxu0 0.0
      %599 = vmatpush1.msra.mxu0 0.0
      %600 = vmatprep.subr.mxu0 0.0
      %601 = vmatpush1.msra.mxu0 0.0
      %602 = vmatprep.subr.mxu0 0.0
      %603 = vmatpush1.msra.mxu0 0.0
      %604 = vmatprep.subr.mxu0 0.0
      %605 = vmatpush1.msra.mxu0 0.0
      %606 = vmatprep.subr.mxu0 0.0
      %607 = vmatpush1.msra.mxu0 0.0
      %608 = vmatprep.subr.mxu0 0.0
      %609 = vmatpush1.msra.mxu0 0.0
      %610 = vmatprep.subr.mxu0 0.0
      %611 = vmatpush1.msra.mxu0 0.0
      %612 = vmatprep.subr.mxu0 0.0
      %613 = vmatpush1.msra.mxu0 0.0
      %614 = vmatprep.subr.mxu0 0.0
      %615 = vmatpush1.msra.mxu0 0.0
      %616 = vmatprep.subr.mxu0 0.0
      %617 = vmatpush1.msra.mxu0 0.0
      %618 = vmatprep.subr.mxu0 0.0
      %619 = vmatpush1.msra.mxu0 0.0
      %620 = vmatprep.subr.mxu0 0.0
      %621 = vmatpush1.msra.mxu0 0.0
      %622 = vmatprep.subr.mxu0 0.0
      %623 = vmatpush1.msra.mxu0 0.0
      %624 = vmatprep.subr.mxu0 0.0
      %625 = vmatpush1.msra.mxu0 0.0
      %626 = vmatprep.subr.mxu0 0.0
      %627 = vmatpush1.msra.mxu0 0.0
      %628 = vmatprep.subr.mxu0 0.0
      %629 = vmatpush1.msra.mxu0 0.0
      %630 = vmatprep.subr.mxu0 0.0
      %631 = vmatpush1.msra.mxu0 0.0
      %632 = vmatprep.subr.mxu0 0.0
      %633 = vmatpush1.msra.mxu0 0.0
      %634 = vmatprep.subr.mxu0 0.0
      %635 = vmatpush1.msra.mxu0 0.0
      %636 = vmatprep.subr.mxu0 0.0
      %637 = vmatpush1.msra.mxu0 0.0
      %638 = vmatprep.subr.mxu0 0.0
      %639 = vmatpush1.msra.mxu0 0.0
      %640 = vmatprep.subr.mxu0 0.0
      %641 = vmatpush1.msra.mxu0 0.0
      %642 = vmatprep.subr.mxu0 0.0
      %643 = vmatpush1.msra.mxu0 0.0
      %644 = vmatprep.subr.mxu0 0.0
      %645 = vmatpush1.msra.mxu0 0.0
      %646 = vmatprep.subr.mxu0 0.0
      %647 = vmatpush1.msra.mxu0 0.0
      %648 = vmatprep.mubr.f32.mxu0 0.0
      %649 = vmatmul.mubr.f32.gmra.mrb[0].mxu0 %v502
      %v650 = vpop.f32.mrb[0].mxu0
      %v651 = vadd.f32 0.0, %v650
      %v652 = vpop.f32.mrb[0].mxu0
      %653 = vmatprep.mubr.f32.mxu0 0.0
      %654 = vmatmul.mubr.f32.gmra.mrb[0].mxu0 %v505
      %v655 = vpop.f32.mrb[0].mxu0
      %v656 = vadd.f32 0.0, %v655
      %v657 = vpop.f32.mrb[0].mxu0
      %658 = vdwg.mxu0
      %s659 = scalar_lea.vmem %s332, 16
      %660 = vst [vmem:[%s659] sm:$0xff] %v651
      %661 = vst [vmem:[%s659 + $0x8] sm:$0xff] %v656
      %p662 = scmp.lt.s32.totalorder %s23, 1
      %s663 = scalar_select %p662, %s23, 1
      %p664 = scmp.lt.s32.totalorder %s24, 0
      %s665 = scalar_select %p664, %s24, 0
      %s666 = smul.addr %s663, 4
      %s667 = sadd.s32 %s665, %s666
      %s668 = smul.addr %s667, 8
      %s669 = scalar_lea.vmem %s5, %s668
      %p670 = scmp.lt.s32.totalorder %s23, 1
      %s671 = scalar_select %p670, %s23, 1
      %p672 = scmp.lt.s32.totalorder %s24, 0
      %s673 = scalar_select %p672, %s24, 0
      %s674 = smul.addr %s671, 4
      %s675 = sadd.s32 %s673, %s674
      %s676 = smul.addr %s675, 8
      %s677 = scalar_lea.vmem %s6, %s676
      // Predicated region
      $region41: #{galrnet_so_forward.3} parent=39 // pred_check
        %p678 = pneg %p170
      $region42: #{galrnet_so_forward.3} parent=39 // pred_check_branch
        %680 = sbr.rel (%p678) target = $region44
      $region43: #{galrnet_so_forward.3} parent=39 // pred_region
        _
      $region44: #{galrnet_so_forward.3} parent=39 // pred_fallthru
        _
      // Predicated region
      $region45: #{galrnet_so_forward.3} parent=39 // pred_check
        %p681 = pneg %p198
      $region46: #{galrnet_so_forward.3} parent=39 // pred_check_branch
        %683 = sbr.rel (%p681) target = $region48
      $region47: #{galrnet_so_forward.3} parent=39 // pred_region
        _
      $region48: #{galrnet_so_forward.3} parent=39 // pred_fallthru
        _
    $region40: #{galrnet_so_forward.3} parent=5 // pred_fallthru
      _
    %p684 = scmp.le.s32.totalorder 2, %s14
    // Predicated region
    $region49: #{galrnet_so_forward.3} parent=5 // pred_check
      %p685 = pneg %p684
    $region50: #{galrnet_so_forward.3} parent=5 // pred_check_branch
      %687 = sbr.rel (%p685) target = $region52
    $region51: #{galrnet_so_forward.3} parent=5 // pred_region
      %s688 = ssub.s32 %s14, 2
      // Predicated region
      $region53: #{galrnet_so_forward.3} parent=51 // pred_check
        %p689 = pneg %p176
      $region54: #{galrnet_so_forward.3} parent=51 // pred_check_branch
        %691 = sbr.rel (%p689) target = $region56
      $region55: #{galrnet_so_forward.3} parent=51 // pred_region
        %p692 = scmp.lt.s32.totalorder %s25, 1
        %s693 = scalar_select %p692, %s25, 1
        %p694 = scmp.lt.s32.totalorder %s26, 0
        %s695 = scalar_select %p694, %s26, 0
        %s696 = smul.addr %s693, 4
        %s697 = sadd.s32 %s695, %s696
        %s698 = smul.addr %s697, 8
        %s699 = scalar_lea.vmem %s5, %s698
      $region56: #{galrnet_so_forward.3} parent=51 // pred_fallthru
        _
      // Predicated region
      $region57: #{galrnet_so_forward.3} parent=51 // pred_check
        %p700 = pneg %p204
      $region58: #{galrnet_so_forward.3} parent=51 // pred_check_branch
        %702 = sbr.rel (%p700) target = $region60
      $region59: #{galrnet_so_forward.3} parent=51 // pred_region
        %p703 = scmp.lt.s32.totalorder %s25, 1
        %s704 = scalar_select %p703, %s25, 1
        %p705 = scmp.lt.s32.totalorder %s26, 0
        %s706 = scalar_select %p705, %s26, 0
        %s707 = smul.addr %s704, 4
        %s708 = sadd.s32 %s706, %s707
        %s709 = smul.addr %s708, 8
        %s710 = scalar_lea.vmem %s6, %s709
      $region60: #{galrnet_so_forward.3} parent=51 // pred_fallthru
        _
    $region52: #{galrnet_so_forward.3} parent=5 // pred_fallthru
      _
  $region6: #{galrnet_so_forward.3} parent=0 // loop_footer
    %s18 = sadd.s32 1, %s14
  $region7: #{galrnet_so_forward.3} parent=0 // loop_footer_branch
    %13 = sbr.rel target = $region3
  $region8: #{galrnet_so_forward.3} parent=0 // loop_exit
    _

</llo_original>
